<compile_context>
chip_gen: v6e
topology: v6e:2x2x1
jax: 0.10.0
libtpu: 0.0.40
codegen_flags: <defaults>
</compile_context>

<pallas_src>
import functools

import numpy as np

import jax
import jax.numpy as jnp
from jax import lax
from jax.experimental import pallas as pl
from jax.experimental.pallas import tpu as pltpu


def _elu(v):
    # ELU(alpha=1): v for v>0 else exp(v)-1.  The exp argument is clamped so the unselected
    # branch can never overflow to inf.
    return jnp.where(v > 0, v, jnp.exp(jnp.minimum(v, 0.0)) - 1.0)


def _round_up(n, m):
    return ((n + m - 1) // m) * m


def _resblock_kernel(
    # VMEM inputs
    row_ref, col_ref, x_ref, ea_ref, invdeg_ref,
    wdown_ref, wedge_ref, wn1_ref, wn2_ref, wup_ref, bsm_ref, bup_ref,
    # outputs
    xo_ref, eo_ref,
    # scratch
    hn_s, agg_s,
    *, n_real_edges, edge_tile, n_nodes_pad, compute_dtype):

    t = pl.program_id(0)
    TE = edge_tile
    Np = n_nodes_pad
    cdt = compute_dtype
    f32 = jnp.float32

    # ---- first tile: projectDown_node + bn1_node + ELU; zero the scatter accumulator -----
    @pl.when(t == 0)
    def _():
        hn0 = _elu(jnp.dot(x_ref[...].astype(cdt), wdown_ref[0],
                           preferred_element_type=f32) + bsm_ref[0:1, :])
        hn_s[...] = hn0.astype(cdt)
        agg_s[...] = jnp.zeros_like(agg_s)

    # ---- per-edge-tile work ----------------------------------------------------------------
    ea = ea_ref[...]                                                 # [TE, Cp] f32
    he0 = _elu(jnp.dot(ea.astype(cdt), wdown_ref[1],
                       preferred_element_type=f32) + bsm_ref[1:2, :])

    # Vectorized gather h_node[row]/h_node[col]: per-tile one-hot matmuls on the MXU
    # (replaces the former per-edge dynamic-row-copy loop + SMEM scalar reads).
    node_ids = lax.broadcasted_iota(jnp.int32, (TE, Np), 1)
    oh_row = (node_ids == row_ref[...]).astype(f32).astype(cdt)      # [TE, Np]
    oh_col = (node_ids == col_ref[...]).astype(f32).astype(cdt)      # [TE, Np]
    hn = hn_s[...]
    src = jnp.dot(oh_row, hn, preferred_element_type=f32).astype(cdt)
    dst = jnp.dot(oh_col, hn, preferred_element_type=f32).astype(cdt)

    # EdgeModel (K-merged single matmul): Linear(cat([src, dst, edge_attr])) + BN + ELU
    he = _elu(jnp.dot(jnp.concatenate([src, dst, he0.astype(cdt)], axis=1),
                      wedge_ref[...], preferred_element_type=f32) + bsm_ref[2:3, :])
    he_c = he.astype(cdt)

    # projectUp_edge + bn2_edge (folded) + residual + ELU   (lane-dense [TE, Cp] store)
    eo_ref[...] = _elu(jnp.dot(he_c, wup_ref[1], preferred_element_type=f32)
                       + bup_ref[1:2, :] + ea)

    # NodeModel mlp1 (K-merged) on cat([h_node[row], new_edge_attr])
    out1 = _elu(jnp.dot(jnp.concatenate([src, he_c], axis=1),
                        wn1_ref[...], preferred_element_type=f32) + bsm_ref[3:4, :])

    # Mask padded edges, then segment-sum scatter via one-hot^T @ out1 on the MXU.
    # Duplicate col indices within a tile are summed correctly by the matmul.
    e_ids = t * TE + lax.broadcasted_iota(jnp.int32, (TE, 1), 0)
    out1_m = jnp.where(e_ids < n_real_edges, out1, 0.0).astype(cdt)
    agg_s[...] += lax.dot_general(oh_col, out1_m, (((0,), (0,)), ((), ())),
                                  preferred_element_type=f32)

    # ---- last tile: scatter_mean finish, node mlp2, projectUp_node, residual ---------------
    @pl.when(t == pl.num_programs(0) - 1)
    def _():
        agg = (agg_s[...] * invdeg_ref[...]).astype(cdt)             # [Np, C4p]
        hn2 = _elu(jnp.dot(jnp.concatenate([hn_s[...], agg], axis=1),
                           wn2_ref[...], preferred_element_type=f32) + bsm_ref[4:5, :])
        xo_ref[...] = _elu(jnp.dot(hn2.astype(cdt), wup_ref[0],
                                   preferred_element_type=f32)
                           + bup_ref[0:1, :] + x_ref[...])


def resblock_forward(x, edge_attr, edge_index, params, *,
                     edge_tile=None, compute_dtype=jnp.bfloat16):
    """params: folded (weight, bias) arrays as produced by make_params (biases [1, out_dim])."""
    (w1n, b1n, w1e, b1e, we, be, wn1, bn1, wn2, bn2, wun, bun, wue, bue) = params
    N, C = x.shape
    E = edge_attr.shape[0]
    C4 = C // 4
    f32 = jnp.float32
    cdt = compute_dtype

    Cp = _round_up(C, 128)
    C4p = _round_up(C4, 128)
    Np = _round_up(N, 8)
    if edge_tile is None:
        edge_tile = min(512, _round_up(E, 8))
    TE = _round_up(edge_tile, 8)
    Ep = _round_up(max(E, TE), TE)
    n_tiles = Ep // TE

    def pad2(a, r, c):
        return jnp.zeros((r, c), a.dtype).at[:a.shape[0], :a.shape[1]].set(a)

    # ---- activations / indices --------------------------------------------------------------
    x_p = pad2(x.astype(f32), Np, Cp)
    ea_p = pad2(edge_attr.astype(f32), Ep, Cp)
    row = edge_index[:, 0].astype(jnp.int32)
    col = edge_index[:, 1].astype(jnp.int32)
    # lane-layout index vectors so the kernel can build per-tile one-hot matrices
    row_p = jnp.zeros((Ep, 1), jnp.int32).at[:E, 0].set(row)
    col_p = jnp.zeros((Ep, 1), jnp.int32).at[:E, 0].set(col)

    # in-degree for scatter_mean computed once wrapper-side (depends only on edge_index)
    deg = jnp.zeros((Np,), f32).at[col].add(1.0)
    inv_deg = (1.0 / jnp.maximum(deg, 1.0)).reshape(Np, 1)

    # ---- parameters: split + K-merge the concatenated MLP weights, pad, stack ---------------
    w_down = jnp.stack([pad2(w1n, Cp, C4p), pad2(w1e, Cp, C4p)]).astype(cdt)

    def merge_k(blocks):
        # Place K-blocks at C4p-aligned row offsets so one [k*C4p, C4p] matmul matches
        # cat(inputs) @ cat(weight blocks) with zero-padded channels.
        out = jnp.zeros((len(blocks) * C4p, C4p), f32)
        for i, blk in enumerate(blocks):
            out = out.at[i * C4p:i * C4p + blk.shape[0], :blk.shape[1]].set(blk)
        return out.astype(cdt)

    w_edge = merge_k([we[:C4], we[C4:2 * C4], we[2 * C4:]])   # [3*C4p, C4p]
    w_n1 = merge_k([wn1[:C4], wn1[C4:]])                      # [2*C4p, C4p]
    w_n2 = merge_k([wn2[:C4], wn2[C4:]])                      # [2*C4p, C4p]
    w_up = jnp.stack([pad2(wun, C4p, Cp), pad2(wue, C4p, Cp)]).astype(cdt)

    b_sm = jnp.zeros((8, C4p), f32)
    for i, b in enumerate((b1n, b1e, be, bn1, bn2)):
        b_sm = b_sm.at[i, :C4].set(b.reshape(-1))
    b_up = jnp.zeros((8, Cp), f32)
    for i, b in enumerate((bun, bue)):
        b_up = b_up.at[i, :C].set(b.reshape(-1))

    kernel = functools.partial(_resblock_kernel, n_real_edges=E, edge_tile=TE,
                               n_nodes_pad=Np, compute_dtype=cdt)

    # ---- VMEM budget / cost hints ------------------------------------------------------------
    csz = np.dtype(cdt).itemsize
    w_bytes = ((2 * Cp * C4p + 3 * C4p * C4p + 4 * C4p * C4p + 2 * C4p * Cp) * csz
               + (8 * C4p + 8 * Cp) * 4)
    tile_bytes = 2 * (2 * TE * Cp * 4 + 2 * TE * 4)            # double-buffered ea/eo/row/col
    resident_bytes = 2 * Np * Cp * 4 + Np * 4 + w_bytes        # x, xo, inv_deg, weights
    scratch_bytes = Np * C4p * (csz + 4) + TE * Np * csz       # hn_s, agg_s, one-hot temp
    vmem_limit = int(min(64 * 1024 * 1024,
                         max(2 * (tile_bytes + resident_bytes + scratch_bytes),
                             16 * 1024 * 1024)))

    flops = 2 * (Np * Cp * C4p + Ep * Cp * C4p + 3 * Ep * Np * C4p
                 + 5 * Ep * C4p * C4p + 2 * Np * C4p * C4p
                 + Np * C4p * Cp + Ep * C4p * Cp)
    cost = pl.CostEstimate(
        flops=int(flops),
        transcendentals=int(2 * (Np + Ep) * C4p + (Np + Ep) * Cp),
        bytes_accessed=int(4 * (2 * Np * Cp + 2 * Ep * Cp + Np + 2 * Ep) + w_bytes))

    xo_p, eo_p = pl.pallas_call(
        kernel,
        out_shape=(jax.ShapeDtypeStruct((Np, Cp), f32),
                   jax.ShapeDtypeStruct((Ep, Cp), f32)),
        grid=(n_tiles,),
        in_specs=[
            pl.BlockSpec((TE, 1), lambda t: (t, 0)),             # row indices (VMEM, tiled)
            pl.BlockSpec((TE, 1), lambda t: (t, 0)),             # col indices (VMEM, tiled)
            pl.BlockSpec((Np, Cp), lambda t: (0, 0)),            # x (resident)
            pl.BlockSpec((TE, Cp), lambda t: (t, 0)),            # edge_attr tile
            pl.BlockSpec((Np, 1), lambda t: (0, 0)),             # 1/deg
            pl.BlockSpec((2, Cp, C4p), lambda t: (0, 0, 0)),     # projectDown weights
            pl.BlockSpec((3 * C4p, C4p), lambda t: (0, 0)),      # edge_mlp weights (K-merged)
            pl.BlockSpec((2 * C4p, C4p), lambda t: (0, 0)),      # node_mlp_1 weights (K-merged)
            pl.BlockSpec((2 * C4p, C4p), lambda t: (0, 0)),      # node_mlp_2 weights (K-merged)
            pl.BlockSpec((2, C4p, Cp), lambda t: (0, 0, 0)),     # projectUp weights
            pl.BlockSpec((8, C4p), lambda t: (0, 0)),            # small biases
            pl.BlockSpec((8, Cp), lambda t: (0, 0)),             # projectUp biases
        ],
        out_specs=(
            pl.BlockSpec((Np, Cp), lambda t: (0, 0)),            # node out (resident)
            pl.BlockSpec((TE, Cp), lambda t: (t, 0)),            # edge out tile
        ),
        scratch_shapes=[
            pltpu.VMEM((Np, C4p), cdt),   # h_node after projectDown (only ever feeds the MXU)
            pltpu.VMEM((Np, C4p), f32),   # scatter accumulator (f32)
        ],
        compiler_params=pltpu.CompilerParams(
            dimension_semantics=("arbitrary",),
            vmem_limit_bytes=vmem_limit),
        cost_estimate=cost,
    )(row_p, col_p, x_p, ea_p, inv_deg, w_down, w_edge, w_n1, w_n2, w_up, b_sm, b_up)

    return xo_p[:N, :C], eo_p[:E, :C]


# ------------------------------ parameter setup (glue) ---------------------------------

def _fold_linear_bn(W, b, gamma, beta, mean, var, eps=1e-5):
    """Fold eval-mode BatchNorm1d into the preceding Linear: y = x@W' + b'."""
    scale = gamma / jnp.sqrt(var + eps)
    return W * scale[None, :], (b - mean) * scale + beta


def make_params(key, C):
    C4 = C // 4
    ks = iter(jax.random.split(key, 64))

    def lin(din, dout):
        w = 0.1 * jax.random.normal(next(ks), (din, dout), jnp.float32)
        b = 0.05 * jax.random.normal(next(ks), (dout,), jnp.float32)
        return w, b

    def bn(d):
        gamma = 1.0 + 0.1 * jax.random.normal(next(ks), (d,), jnp.float32)
        beta = 0.05 * jax.random.normal(next(ks), (d,), jnp.float32)
        mean = 0.05 * jax.random.normal(next(ks), (d,), jnp.float32)
        var = 1.0 + 0.1 * jnp.abs(jax.random.normal(next(ks), (d,), jnp.float32))
        return gamma, beta, mean, var

    folded = []
    for din, dout in [(C, C4), (C, C4)]:                           # projectDown_{node,edge}+bn1
        folded.append(_fold_linear_bn(*lin(din, dout), *bn(dout)))
    for din, dout in [(3 * C4, C4), (2 * C4, C4), (2 * C4, C4)]:   # edge_mlp, node_mlp_1/2
        folded.append(_fold_linear_bn(*lin(din, dout), *bn(dout)))
    for din, dout in [(C4, C), (C4, C)]:                           # projectUp_{node,edge}+bn2
        folded.append(_fold_linear_bn(*lin(din, dout), *bn(dout)))

    flat = []
    for w, b in folded:
        flat.append(w)
        flat.append(b.reshape(1, -1))
    return tuple(flat)


def reference(x, ea, edge_index, params):
    (w1n, b1n, w1e, b1e, we, be, wn1, bn1, wn2, bn2, wun, bun, wue, bue) = params
    row, col = edge_index[:, 0], edge_index[:, 1]
    hn = _elu(x @ w1n + b1n)
    he = _elu(ea @ w1e + b1e)
    src, dst = hn[row], hn[col]
    he = _elu(jnp.concatenate([src, dst, he], 1) @ we + be)
    out1 = _elu(jnp.concatenate([src, he], 1) @ wn1 + bn1)
    N = x.shape[0]
    sums = jnp.zeros((N, out1.shape[1]), jnp.float32).at[col].add(out1)
    counts = jnp.zeros((N,), jnp.float32).at[col].add(1.0)
    agg = sums / jnp.maximum(counts, 1.0)[:, None]   # zero-degree nodes get 0 (scatter_mean)
    hn = _elu(jnp.concatenate([hn, agg], 1) @ wn2 + bn2)
    xo = _elu(hn @ wun + bun + x)
    eo = _elu(he @ wue + bue + ea)
    return xo, eo


if __name__ == "__main__":
    key = jax.random.PRNGKey(0)
    k_x, k_e, k_idx, k_p = jax.random.split(key, 4)

    N, E, C = 16, 48, 64          # nodes, edges, in_channels (C // 4 == 16)
    x = jax.random.normal(k_x, (N, C), jnp.float32)
    edge_attr = jax.random.normal(k_e, (E, C), jnp.float32)
    edge_index = jax.random.randint(k_idx, (E, 2), 0, N, jnp.int32)

    params = make_params(k_p, C)
    xo_gold, eo_gold = reference(x, edge_attr, edge_index, params)

    # f32 MXU path; edge_tile=32 -> 2-tile grid exercises accumulation + padded-edge masking.
    fwd_f32 = jax.jit(functools.partial(resblock_forward,
                                        edge_tile=32, compute_dtype=jnp.float32))
    xo32, eo32 = fwd_f32(x, edge_attr, edge_index, params)
    jax.block_until_ready((xo32, eo32))
    assert jnp.allclose(xo32, xo_gold, rtol=5e-3, atol=5e-3)
    assert jnp.allclose(eo32, eo_gold, rtol=5e-3, atol=5e-3)

    # bf16 MXU inputs, f32 accumulation (preferred on v6e/v7x); loose tolerance vs f32 ref.
    fwd_bf16 = jax.jit(functools.partial(resblock_forward,
                                         edge_tile=32, compute_dtype=jnp.bfloat16))
    xo16, eo16 = fwd_bf16(x, edge_attr, edge_index, params)
    jax.block_until_ready((xo16, eo16))
    assert jnp.allclose(xo16, xo_gold, rtol=5e-2, atol=5e-2)
    assert jnp.allclose(eo16, eo_gold, rtol=5e-2, atol=5e-2)

    print("KERNEL_OK")
</pallas_src>

<mosaic_0001>
module attributes {stable_mosaic.version = 11 : i64} {
  func.func private @main(%arg0: i32) attributes {dimension_semantics = [#tpu.dimension_semantics<core_parallel>], iteration_bounds = array<i64: 2>, tpu.core_type = #tpu.core_type<sc_scalar_subcore>, window_params = []} {
    return
  }
}

module attributes {stable_mosaic.version = 11 : i64} {
  func.func private @main(%arg0: i32) attributes {dimension_semantics = [#tpu.dimension_semantics<core_parallel>], iteration_bounds = array<i64: 2>, tpu.core_type = #tpu.core_type<sc_scalar_subcore>, window_params = []} {
    return
  }
}

module attributes {stable_mosaic.version = 11 : i64} {
  func.func @_resblock_kernel(%arg0: i32, %arg1: memref<32x1xi32, #tpu.memory_space<vmem>>, %arg2: memref<32x1xi32, #tpu.memory_space<vmem>>, %arg3: memref<16x128xf32, #tpu.memory_space<vmem>>, %arg4: memref<32x128xf32, #tpu.memory_space<vmem>>, %arg5: memref<16x1xf32, #tpu.memory_space<vmem>>, %arg6: memref<2x128x128xf32, #tpu.memory_space<vmem>>, %arg7: memref<384x128xf32, #tpu.memory_space<vmem>>, %arg8: memref<256x128xf32, #tpu.memory_space<vmem>>, %arg9: memref<256x128xf32, #tpu.memory_space<vmem>>, %arg10: memref<2x128x128xf32, #tpu.memory_space<vmem>>, %arg11: memref<8x128xf32, #tpu.memory_space<vmem>>, %arg12: memref<8x128xf32, #tpu.memory_space<vmem>>, %arg13: memref<16x128xf32, #tpu.memory_space<vmem>>, %arg14: memref<32x128xf32, #tpu.memory_space<vmem>>, %arg15: memref<16x128xf32, #tpu.memory_space<vmem>>, %arg16: memref<16x128xf32, #tpu.memory_space<vmem>>) attributes {dimension_semantics = [#tpu.dimension_semantics<arbitrary>], iteration_bounds = array<i64: 2>, scalar_prefetch = 0 : i64, scratch_operands = 2 : i64, tpu.core_type = #tpu.core_type<tc>, window_params = [{transform_indices = @transform_0, window_bounds = array<i64: 32, 1>}, {transform_indices = @transform_1, window_bounds = array<i64: 32, 1>}, {pipeline_mode = #tpu.pipeline_mode<synchronous>, transform_indices = @transform_2, window_bounds = array<i64: 16, 128>}, {transform_indices = @transform_3, window_bounds = array<i64: 32, 128>}, {pipeline_mode = #tpu.pipeline_mode<synchronous>, transform_indices = @transform_4, window_bounds = array<i64: 16, 1>}, {pipeline_mode = #tpu.pipeline_mode<synchronous>, transform_indices = @transform_5, window_bounds = array<i64: 2, 128, 128>}, {pipeline_mode = #tpu.pipeline_mode<synchronous>, transform_indices = @transform_6, window_bounds = array<i64: 384, 128>}, {pipeline_mode = #tpu.pipeline_mode<synchronous>, transform_indices = @transform_7, window_bounds = array<i64: 256, 128>}, {pipeline_mode = #tpu.pipeline_mode<synchronous>, transform_indices = @transform_8, window_bounds = array<i64: 256, 128>}, {pipeline_mode = #tpu.pipeline_mode<synchronous>, transform_indices = @transform_9, window_bounds = array<i64: 2, 128, 128>}, {pipeline_mode = #tpu.pipeline_mode<synchronous>, transform_indices = @transform_10, window_bounds = array<i64: 8, 128>}, {pipeline_mode = #tpu.pipeline_mode<synchronous>, transform_indices = @transform_11, window_bounds = array<i64: 8, 128>}, {pipeline_mode = #tpu.pipeline_mode<synchronous>, transform_indices = @transform_12, window_bounds = array<i64: 16, 128>}, {transform_indices = @transform_13, window_bounds = array<i64: 32, 128>}]} {
    %c0_i32 = arith.constant 0 : i32
    %0 = arith.cmpi eq, %arg0, %c0_i32 : i32
    %1 = arith.extui %0 : i1 to i32
    %c0_i32_0 = arith.constant 0 : i32
    %2 = arith.cmpi ne, %1, %c0_i32_0 : i32
    scf.if %2 {
      %c0_49 = arith.constant 0 : index
      %c0_50 = arith.constant 0 : index
      %93 = vector.load %arg3[%c0_49, %c0_50] : memref<16x128xf32, #tpu.memory_space<vmem>>, vector<16x128xf32>
      %c0_51 = arith.constant 0 : index
      %c0_52 = arith.constant 0 : index
      %c0_53 = arith.constant 0 : index
      %94 = vector.load %arg6[%c0_51, %c0_52, %c0_53] : memref<2x128x128xf32, #tpu.memory_space<vmem>>, vector<1x128x128xf32>
      %95 = vector.shape_cast %94 : vector<1x128x128xf32> to vector<128x128xf32>
      %cst_54 = arith.constant dense<0.000000e+00> : vector<16x128xf32>
      %96 = tpu.matmul %93, %95, %cst_54 {dimension_numbers = #tpu.dot_dimension_numbers<[1], [0], [0], [1], [0, 0, 1, 1], [], []>} : vector<16x128xf32>, vector<128x128xf32>, vector<16x128xf32> -> vector<16x128xf32>
      %c0_55 = arith.constant 0 : index
      %c0_56 = arith.constant 0 : index
      %97 = vector.load %arg11[%c0_55, %c0_56] : memref<8x128xf32, #tpu.memory_space<vmem>>, vector<1x128xf32>
      %98 = vector.broadcast %97 : vector<1x128xf32> to vector<16x128xf32>
      %99 = arith.addf %96, %98 : vector<16x128xf32>
      %cst_57 = arith.constant 0.000000e+00 : f32
      %100 = vector.broadcast %cst_57 : f32 to vector<16x128xf32>
      %101 = arith.cmpf ogt, %99, %100 : vector<16x128xf32>
      %cst_58 = arith.constant 0.000000e+00 : f32
      %102 = vector.broadcast %cst_58 : f32 to vector<16x128xf32>
      %103 = arith.minimumf %99, %102 : vector<16x128xf32>
      %104 = math.exp %103 : vector<16x128xf32>
      %cst_59 = arith.constant 1.000000e+00 : f32
      %105 = vector.broadcast %cst_59 : f32 to vector<16x128xf32>
      %106 = arith.subf %104, %105 : vector<16x128xf32>
      %107 = arith.select %101, %99, %106 : vector<16x128xi1>, vector<16x128xf32>
      %c0_60 = arith.constant 0 : index
      %c0_61 = arith.constant 0 : index
      %108 = vector.load %arg15[%c0_60, %c0_61] : memref<16x128xf32, #tpu.memory_space<vmem>>, vector<16x128xf32>
      tpu.vector_store %arg15[%c0_60, %c0_61], %107 {strides = array<i32>} : memref<16x128xf32, #tpu.memory_space<vmem>>, vector<16x128xf32>,
      %cst_62 = arith.constant 0.000000e+00 : f32
      %109 = vector.broadcast %cst_62 : f32 to vector<16x128xf32>
      %c0_63 = arith.constant 0 : index
      %c0_64 = arith.constant 0 : index
      %110 = vector.load %arg16[%c0_63, %c0_64] : memref<16x128xf32, #tpu.memory_space<vmem>>, vector<16x128xf32>
      tpu.vector_store %arg16[%c0_63, %c0_64], %109 {strides = array<i32>} : memref<16x128xf32, #tpu.memory_space<vmem>>, vector<16x128xf32>,
    } else {
    }
    %c0 = arith.constant 0 : index
    %c0_1 = arith.constant 0 : index
    %3 = vector.load %arg4[%c0, %c0_1] : memref<32x128xf32, #tpu.memory_space<vmem>>, vector<32x128xf32>
    %c1 = arith.constant 1 : index
    %c0_2 = arith.constant 0 : index
    %c0_3 = arith.constant 0 : index
    %4 = vector.load %arg6[%c1, %c0_2, %c0_3] : memref<2x128x128xf32, #tpu.memory_space<vmem>>, vector<1x128x128xf32>
    %5 = vector.shape_cast %4 : vector<1x128x128xf32> to vector<128x128xf32>
    %cst = arith.constant dense<0.000000e+00> : vector<32x128xf32>
    %6 = tpu.matmul %3, %5, %cst {dimension_numbers = #tpu.dot_dimension_numbers<[1], [0], [0], [1], [0, 0, 1, 1], [], []>} : vector<32x128xf32>, vector<128x128xf32>, vector<32x128xf32> -> vector<32x128xf32>
    %c1_4 = arith.constant 1 : index
    %c0_5 = arith.constant 0 : index
    %7 = vector.load %arg11[%c1_4, %c0_5] : memref<8x128xf32, #tpu.memory_space<vmem>>, vector<1x128xf32>
    %8 = vector.broadcast %7 : vector<1x128xf32> to vector<32x128xf32>
    %9 = arith.addf %6, %8 : vector<32x128xf32>
    %cst_6 = arith.constant 0.000000e+00 : f32
    %10 = vector.broadcast %cst_6 : f32 to vector<32x128xf32>
    %11 = arith.cmpf ogt, %9, %10 : vector<32x128xf32>
    %cst_7 = arith.constant 0.000000e+00 : f32
    %12 = vector.broadcast %cst_7 : f32 to vector<32x128xf32>
    %13 = arith.minimumf %9, %12 : vector<32x128xf32>
    %14 = math.exp %13 : vector<32x128xf32>
    %cst_8 = arith.constant 1.000000e+00 : f32
    %15 = vector.broadcast %cst_8 : f32 to vector<32x128xf32>
    %16 = arith.subf %14, %15 : vector<32x128xf32>
    %17 = arith.select %11, %9, %16 : vector<32x128xi1>, vector<32x128xf32>
    %18 = tpu.iota {dimensions = array<i32: 1>} : vector<32x16xi32>
    %c0_9 = arith.constant 0 : index
    %c0_10 = arith.constant 0 : index
    %19 = vector.load %arg1[%c0_9, %c0_10] : memref<32x1xi32, #tpu.memory_space<vmem>>, vector<32x1xi32>
    %20 = vector.broadcast %19 : vector<32x1xi32> to vector<32x16xi32>
    %21 = arith.cmpi eq, %18, %20 : vector<32x16xi32>
    %22 = arith.extui %21 : vector<32x16xi1> to vector<32x16xi32>
    %23 = arith.sitofp %22 : vector<32x16xi32> to vector<32x16xf32>
    %c0_11 = arith.constant 0 : index
    %c0_12 = arith.constant 0 : index
    %24 = vector.load %arg2[%c0_11, %c0_12] : memref<32x1xi32, #tpu.memory_space<vmem>>, vector<32x1xi32>
    %25 = vector.broadcast %24 : vector<32x1xi32> to vector<32x16xi32>
    %26 = arith.cmpi eq, %18, %25 : vector<32x16xi32>
    %27 = arith.extui %26 : vector<32x16xi1> to vector<32x16xi32>
    %28 = arith.sitofp %27 : vector<32x16xi32> to vector<32x16xf32>
    %c0_13 = arith.constant 0 : index
    %c0_14 = arith.constant 0 : index
    %29 = vector.load %arg15[%c0_13, %c0_14] : memref<16x128xf32, #tpu.memory_space<vmem>>, vector<16x128xf32>
    %cst_15 = arith.constant dense<0.000000e+00> : vector<32x128xf32>
    %30 = tpu.matmul %23, %29, %cst_15 {dimension_numbers = #tpu.dot_dimension_numbers<[1], [0], [0], [1], [0, 0, 1, 1], [], []>} : vector<32x16xf32>, vector<16x128xf32>, vector<32x128xf32> -> vector<32x128xf32>
    %cst_16 = arith.constant dense<0.000000e+00> : vector<32x128xf32>
    %31 = tpu.matmul %28, %29, %cst_16 {dimension_numbers = #tpu.dot_dimension_numbers<[1], [0], [0], [1], [0, 0, 1, 1], [], []>} : vector<32x16xf32>, vector<16x128xf32>, vector<32x128xf32> -> vector<32x128xf32>
    %32 = tpu.concatenate %30, %31, %17 in 1 : vector<32x128xf32>, vector<32x128xf32>, vector<32x128xf32> -> vector<32x384xf32>
    %c0_17 = arith.constant 0 : index
    %c0_18 = arith.constant 0 : index
    %33 = vector.load %arg7[%c0_17, %c0_18] : memref<384x128xf32, #tpu.memory_space<vmem>>, vector<384x128xf32>
    %cst_19 = arith.constant dense<0.000000e+00> : vector<32x128xf32>
    %34 = tpu.matmul %32, %33, %cst_19 {dimension_numbers = #tpu.dot_dimension_numbers<[1], [0], [0], [1], [0, 0, 1, 1], [], []>} : vector<32x384xf32>, vector<384x128xf32>, vector<32x128xf32> -> vector<32x128xf32>
    %c2 = arith.constant 2 : index
    %c0_20 = arith.constant 0 : index
    %35 = vector.load %arg11[%c2, %c0_20] : memref<8x128xf32, #tpu.memory_space<vmem>>, vector<1x128xf32>
    %36 = vector.broadcast %35 : vector<1x128xf32> to vector<32x128xf32>
    %37 = arith.addf %34, %36 : vector<32x128xf32>
    %cst_21 = arith.constant 0.000000e+00 : f32
    %38 = vector.broadcast %cst_21 : f32 to vector<32x128xf32>
    %39 = arith.cmpf ogt, %37, %38 : vector<32x128xf32>
    %cst_22 = arith.constant 0.000000e+00 : f32
    %40 = vector.broadcast %cst_22 : f32 to vector<32x128xf32>
    %41 = arith.minimumf %37, %40 : vector<32x128xf32>
    %42 = math.exp %41 : vector<32x128xf32>
    %cst_23 = arith.constant 1.000000e+00 : f32
    %43 = vector.broadcast %cst_23 : f32 to vector<32x128xf32>
    %44 = arith.subf %42, %43 : vector<32x128xf32>
    %45 = arith.select %39, %37, %44 : vector<32x128xi1>, vector<32x128xf32>
    %c1_24 = arith.constant 1 : index
    %c0_25 = arith.constant 0 : index
    %c0_26 = arith.constant 0 : index
    %46 = vector.load %arg10[%c1_24, %c0_25, %c0_26] : memref<2x128x128xf32, #tpu.memory_space<vmem>>, vector<1x128x128xf32>
    %47 = vector.shape_cast %46 : vector<1x128x128xf32> to vector<128x128xf32>
    %cst_27 = arith.constant dense<0.000000e+00> : vector<32x128xf32>
    %48 = tpu.matmul %45, %47, %cst_27 {dimension_numbers = #tpu.dot_dimension_numbers<[1], [0], [0], [1], [0, 0, 1, 1], [], []>} : vector<32x128xf32>, vector<128x128xf32>, vector<32x128xf32> -> vector<32x128xf32>
    %c1_28 = arith.constant 1 : index
    %c0_29 = arith.constant 0 : index
    %49 = vector.load %arg12[%c1_28, %c0_29] : memref<8x128xf32, #tpu.memory_space<vmem>>, vector<1x128xf32>
    %50 = vector.broadcast %49 : vector<1x128xf32> to vector<32x128xf32>
    %51 = arith.addf %48, %50 : vector<32x128xf32>
    %52 = arith.addf %51, %3 : vector<32x128xf32>
    %cst_30 = arith.constant 0.000000e+00 : f32
    %53 = vector.broadcast %cst_30 : f32 to vector<32x128xf32>
    %54 = arith.cmpf ogt, %52, %53 : vector<32x128xf32>
    %cst_31 = arith.constant 0.000000e+00 : f32
    %55 = vector.broadcast %cst_31 : f32 to vector<32x128xf32>
    %56 = arith.minimumf %52, %55 : vector<32x128xf32>
    %57 = math.exp %56 : vector<32x128xf32>
    %cst_32 = arith.constant 1.000000e+00 : f32
    %58 = vector.broadcast %cst_32 : f32 to vector<32x128xf32>
    %59 = arith.subf %57, %58 : vector<32x128xf32>
    %60 = arith.select %54, %52, %59 : vector<32x128xi1>, vector<32x128xf32>
    %c0_33 = arith.constant 0 : index
    %c0_34 = arith.constant 0 : index
    %61 = vector.load %arg14[%c0_33, %c0_34] : memref<32x128xf32, #tpu.memory_space<vmem>>, vector<32x128xf32>
    tpu.vector_store %arg14[%c0_33, %c0_34], %60 {strides = array<i32>} : memref<32x128xf32, #tpu.memory_space<vmem>>, vector<32x128xf32>,
    %62 = tpu.concatenate %30, %45 in 1 : vector<32x128xf32>, vector<32x128xf32> -> vector<32x256xf32>
    %c0_35 = arith.constant 0 : index
    %c0_36 = arith.constant 0 : index
    %63 = vector.load %arg8[%c0_35, %c0_36] : memref<256x128xf32, #tpu.memory_space<vmem>>, vector<256x128xf32>
    %cst_37 = arith.constant dense<0.000000e+00> : vector<32x128xf32>
    %64 = tpu.matmul %62, %63, %cst_37 {dimension_numbers = #tpu.dot_dimension_numbers<[1], [0], [0], [1], [0, 0, 1, 1], [], []>} : vector<32x256xf32>, vector<256x128xf32>, vector<32x128xf32> -> vector<32x128xf32>
    %c3 = arith.constant 3 : index
    %c0_38 = arith.constant 0 : index
    %65 = vector.load %arg11[%c3, %c0_38] : memref<8x128xf32, #tpu.memory_space<vmem>>, vector<1x128xf32>
    %66 = vector.broadcast %65 : vector<1x128xf32> to vector<32x128xf32>
    %67 = arith.addf %64, %66 : vector<32x128xf32>
    %cst_39 = arith.constant 0.000000e+00 : f32
    %68 = vector.broadcast %cst_39 : f32 to vector<32x128xf32>
    %69 = arith.cmpf ogt, %67, %68 : vector<32x128xf32>
    %cst_40 = arith.constant 0.000000e+00 : f32
    %70 = vector.broadcast %cst_40 : f32 to vector<32x128xf32>
    %71 = arith.minimumf %67, %70 : vector<32x128xf32>
    %72 = math.exp %71 : vector<32x128xf32>
    %cst_41 = arith.constant 1.000000e+00 : f32
    %73 = vector.broadcast %cst_41 : f32 to vector<32x128xf32>
    %74 = arith.subf %72, %73 : vector<32x128xf32>
    %75 = arith.select %69, %67, %74 : vector<32x128xi1>, vector<32x128xf32>
    %c32_i32 = arith.constant 32 : i32
    %76 = arith.muli %arg0, %c32_i32 : i32
    %77 = tpu.iota {dimensions = array<i32: 0>} : vector<32x1xi32>
    %78 = vector.broadcast %76 : i32 to vector<32x1xi32>
    %79 = arith.addi %78, %77 : vector<32x1xi32>
    %c48_i32 = arith.constant 48 : i32
    %80 = vector.broadcast %c48_i32 : i32 to vector<32x1xi32>
    %81 = arith.cmpi slt, %79, %80 : vector<32x1xi32>
    %cst_42 = arith.constant 0.000000e+00 : f32
    %82 = vector.shape_cast %81 : vector<32x1xi1> to vector<32x1xi1>
    %83 = vector.broadcast %82 : vector<32x1xi1> to vector<32x128xi1>
    %84 = vector.broadcast %cst_42 : f32 to vector<32x128xf32>
    %85 = arith.select %83, %75, %84 : vector<32x128xi1>, vector<32x128xf32>
    %c0_43 = arith.constant 0 : index
    %c0_44 = arith.constant 0 : index
    %86 = vector.load %arg16[%c0_43, %c0_44] : memref<16x128xf32, #tpu.memory_space<vmem>>, vector<16x128xf32>
    %cst_45 = arith.constant dense<0.000000e+00> : vector<16x128xf32>
    %87 = tpu.matmul %28, %85, %cst_45 {dimension_numbers = #tpu.dot_dimension_numbers<[0], [0], [1], [1], [0, 1, 1, 1], [], []>} : vector<32x16xf32>, vector<32x128xf32>, vector<16x128xf32> -> vector<16x128xf32>
    %88 = arith.addf %86, %87 : vector<16x128xf32>
    %c0_46 = arith.constant 0 : index
    %c0_47 = arith.constant 0 : index
    %89 = vector.load %arg16[%c0_46, %c0_47] : memref<16x128xf32, #tpu.memory_space<vmem>>, vector<16x128xf32>
    tpu.vector_store %arg16[%c0_46, %c0_47], %88 {strides = array<i32>} : memref<16x128xf32, #tpu.memory_space<vmem>>, vector<16x128xf32>,
    %c1_i32 = arith.constant 1 : i32
    %90 = arith.cmpi eq, %arg0, %c1_i32 : i32
    %91 = arith.extui %90 : i1 to i32
    %c0_i32_48 = arith.constant 0 : i32
    %92 = arith.cmpi ne, %91, %c0_i32_48 : i32
    scf.if %92 {
      %c0_49 = arith.constant 0 : index
      %c0_50 = arith.constant 0 : index
      %93 = vector.load %arg16[%c0_49, %c0_50] : memref<16x128xf32, #tpu.memory_space<vmem>>, vector<16x128xf32>
      %c0_51 = arith.constant 0 : index
      %c0_52 = arith.constant 0 : index
      %94 = vector.load %arg5[%c0_51, %c0_52] : memref<16x1xf32, #tpu.memory_space<vmem>>, vector<16x1xf32>
      %95 = vector.broadcast %94 : vector<16x1xf32> to vector<16x128xf32>
      %96 = arith.mulf %93, %95 : vector<16x128xf32>
      %c0_53 = arith.constant 0 : index
      %c0_54 = arith.constant 0 : index
      %97 = vector.load %arg15[%c0_53, %c0_54] : memref<16x128xf32, #tpu.memory_space<vmem>>, vector<16x128xf32>
      %98 = tpu.concatenate %97, %96 in 1 : vector<16x128xf32>, vector<16x128xf32> -> vector<16x256xf32>
      %c0_55 = arith.constant 0 : index
      %c0_56 = arith.constant 0 : index
      %99 = vector.load %arg9[%c0_55, %c0_56] : memref<256x128xf32, #tpu.memory_space<vmem>>, vector<256x128xf32>
      %cst_57 = arith.constant dense<0.000000e+00> : vector<16x128xf32>
      %100 = tpu.matmul %98, %99, %cst_57 {dimension_numbers = #tpu.dot_dimension_numbers<[1], [0], [0], [1], [0, 0, 1, 1], [], []>} : vector<16x256xf32>, vector<256x128xf32>, vector<16x128xf32> -> vector<16x128xf32>
      %c4 = arith.constant 4 : index
      %c0_58 = arith.constant 0 : index
      %101 = vector.load %arg11[%c4, %c0_58] : memref<8x128xf32, #tpu.memory_space<vmem>>, vector<1x128xf32>
      %102 = vector.broadcast %101 : vector<1x128xf32> to vector<16x128xf32>
      %103 = arith.addf %100, %102 : vector<16x128xf32>
      %cst_59 = arith.constant 0.000000e+00 : f32
      %104 = vector.broadcast %cst_59 : f32 to vector<16x128xf32>
      %105 = arith.cmpf ogt, %103, %104 : vector<16x128xf32>
      %cst_60 = arith.constant 0.000000e+00 : f32
      %106 = vector.broadcast %cst_60 : f32 to vector<16x128xf32>
      %107 = arith.minimumf %103, %106 : vector<16x128xf32>
      %108 = math.exp %107 : vector<16x128xf32>
      %cst_61 = arith.constant 1.000000e+00 : f32
      %109 = vector.broadcast %cst_61 : f32 to vector<16x128xf32>
      %110 = arith.subf %108, %109 : vector<16x128xf32>
      %111 = arith.select %105, %103, %110 : vector<16x128xi1>, vector<16x128xf32>
      %c0_62 = arith.constant 0 : index
      %c0_63 = arith.constant 0 : index
      %c0_64 = arith.constant 0 : index
      %112 = vector.load %arg10[%c0_62, %c0_63, %c0_64] : memref<2x128x128xf32, #tpu.memory_space<vmem>>, vector<1x128x128xf32>
      %113 = vector.shape_cast %112 : vector<1x128x128xf32> to vector<128x128xf32>
      %cst_65 = arith.constant dense<0.000000e+00> : vector<16x128xf32>
      %114 = tpu.matmul %111, %113, %cst_65 {dimension_numbers = #tpu.dot_dimension_numbers<[1], [0], [0], [1], [0, 0, 1, 1], [], []>} : vector<16x128xf32>, vector<128x128xf32>, vector<16x128xf32> -> vector<16x128xf32>
      %c0_66 = arith.constant 0 : index
      %c0_67 = arith.constant 0 : index
      %115 = vector.load %arg12[%c0_66, %c0_67] : memref<8x128xf32, #tpu.memory_space<vmem>>, vector<1x128xf32>
      %116 = vector.broadcast %115 : vector<1x128xf32> to vector<16x128xf32>
      %117 = arith.addf %114, %116 : vector<16x128xf32>
      %c0_68 = arith.constant 0 : index
      %c0_69 = arith.constant 0 : index
      %118 = vector.load %arg3[%c0_68, %c0_69] : memref<16x128xf32, #tpu.memory_space<vmem>>, vector<16x128xf32>
      %119 = arith.addf %117, %118 : vector<16x128xf32>
      %cst_70 = arith.constant 0.000000e+00 : f32
      %120 = vector.broadcast %cst_70 : f32 to vector<16x128xf32>
      %121 = arith.cmpf ogt, %119, %120 : vector<16x128xf32>
      %cst_71 = arith.constant 0.000000e+00 : f32
      %122 = vector.broadcast %cst_71 : f32 to vector<16x128xf32>
      %123 = arith.minimumf %119, %122 : vector<16x128xf32>
      %124 = math.exp %123 : vector<16x128xf32>
      %cst_72 = arith.constant 1.000000e+00 : f32
      %125 = vector.broadcast %cst_72 : f32 to vector<16x128xf32>
      %126 = arith.subf %124, %125 : vector<16x128xf32>
      %127 = arith.select %121, %119, %126 : vector<16x128xi1>, vector<16x128xf32>
      %c0_73 = arith.constant 0 : index
      %c0_74 = arith.constant 0 : index
      %128 = vector.load %arg13[%c0_73, %c0_74] : memref<16x128xf32, #tpu.memory_space<vmem>>, vector<16x128xf32>
      tpu.vector_store %arg13[%c0_73, %c0_74], %127 {strides = array<i32>} : memref<16x128xf32, #tpu.memory_space<vmem>>, vector<16x128xf32>,
    } else {
    }
    return
  }
  func.func @transform_0(%arg0: i32) -> (i32, i32) {
    %c0_i32 = arith.constant 0 : i32
    %c0_i32_0 = arith.constant 0 : i32
    return %arg0, %c0_i32 : i32, i32
  }
  func.func @transform_1(%arg0: i32) -> (i32, i32) {
    %c0_i32 = arith.constant 0 : i32
    %c0_i32_0 = arith.constant 0 : i32
    return %arg0, %c0_i32 : i32, i32
  }
  func.func @transform_2(%arg0: i32) -> (i32, i32) {
    %c0_i32 = arith.constant 0 : i32
    %c0_i32_0 = arith.constant 0 : i32
    %c0_i32_1 = arith.constant 0 : i32
    return %c0_i32, %c0_i32_0 : i32, i32
  }
  func.func @transform_3(%arg0: i32) -> (i32, i32) {
    %c0_i32 = arith.constant 0 : i32
    %c0_i32_0 = arith.constant 0 : i32
    return %arg0, %c0_i32 : i32, i32
  }
  func.func @transform_4(%arg0: i32) -> (i32, i32) {
    %c0_i32 = arith.constant 0 : i32
    %c0_i32_0 = arith.constant 0 : i32
    %c0_i32_1 = arith.constant 0 : i32
    return %c0_i32, %c0_i32_0 : i32, i32
  }
  func.func @transform_5(%arg0: i32) -> (i32, i32, i32) {
    %c0_i32 = arith.constant 0 : i32
    %c0_i32_0 = arith.constant 0 : i32
    %c0_i32_1 = arith.constant 0 : i32
    %c0_i32_2 = arith.constant 0 : i32
    return %c0_i32, %c0_i32_0, %c0_i32_1 : i32, i32, i32
  }
  func.func @transform_6(%arg0: i32) -> (i32, i32) {
    %c0_i32 = arith.constant 0 : i32
    %c0_i32_0 = arith.constant 0 : i32
    %c0_i32_1 = arith.constant 0 : i32
    return %c0_i32, %c0_i32_0 : i32, i32
  }
  func.func @transform_7(%arg0: i32) -> (i32, i32) {
    %c0_i32 = arith.constant 0 : i32
    %c0_i32_0 = arith.constant 0 : i32
    %c0_i32_1 = arith.constant 0 : i32
    return %c0_i32, %c0_i32_0 : i32, i32
  }
  func.func @transform_8(%arg0: i32) -> (i32, i32) {
    %c0_i32 = arith.constant 0 : i32
    %c0_i32_0 = arith.constant 0 : i32
    %c0_i32_1 = arith.constant 0 : i32
    return %c0_i32, %c0_i32_0 : i32, i32
  }
  func.func @transform_9(%arg0: i32) -> (i32, i32, i32) {
    %c0_i32 = arith.constant 0 : i32
    %c0_i32_0 = arith.constant 0 : i32
    %c0_i32_1 = arith.constant 0 : i32
    %c0_i32_2 = arith.constant 0 : i32
    return %c0_i32, %c0_i32_0, %c0_i32_1 : i32, i32, i32
  }
  func.func @transform_10(%arg0: i32) -> (i32, i32) {
    %c0_i32 = arith.constant 0 : i32
    %c0_i32_0 = arith.constant 0 : i32
    %c0_i32_1 = arith.constant 0 : i32
    return %c0_i32, %c0_i32_0 : i32, i32
  }
  func.func @transform_11(%arg0: i32) -> (i32, i32) {
    %c0_i32 = arith.constant 0 : i32
    %c0_i32_0 = arith.constant 0 : i32
    %c0_i32_1 = arith.constant 0 : i32
    return %c0_i32, %c0_i32_0 : i32, i32
  }
  func.func @transform_12(%arg0: i32) -> (i32, i32) {
    %c0_i32 = arith.constant 0 : i32
    %c0_i32_0 = arith.constant 0 : i32
    %c0_i32_1 = arith.constant 0 : i32
    return %c0_i32, %c0_i32_0 : i32, i32
  }
  func.func @transform_13(%arg0: i32) -> (i32, i32) {
    %c0_i32 = arith.constant 0 : i32
    %c0_i32_0 = arith.constant 0 : i32
    return %arg0, %c0_i32 : i32, i32
  }
}

</mosaic_0001>

<llo_original>
// kernel: resblock_forward.1
$region0: #{resblock_forward.1}
  #allocation0 [shape = 'u32[]', space=smem, size = 0x4, offset = 0x4, fixed_abs, tag = 'smem constant byte address 0x4 - core index']
  #allocation1 [shape = 'u32[144,128]{1,0:T(1,128)}', space=vmem, size = 0x12000, scoped, tag = 'internal scratch']
  #allocation2 [shape = 'f32[16,128]{1,0:T(8,128)}', space=vmem, size = 0x2000, scoped, tag = 'scratch operand']
  #allocation3 [shape = 'f32[16,128]{1,0:T(8,128)}', space=vmem, size = 0x2000, scoped, tag = 'scratch operand']
  %s0 = inlined_call_operand.vmem [shape: s32[64,1], index: 0, kind: input, shape index: {}]
  %s1 = inlined_call_operand.vmem [shape: s32[64,1], index: 1, kind: input, shape index: {}]
  %s2 = inlined_call_operand.vmem [shape: f32[16,128], index: 2, kind: input, shape index: {}]
  %s3 = inlined_call_operand.vmem [shape: f32[64,128], index: 3, kind: input, shape index: {}]
  %s4 = inlined_call_operand.vmem [shape: f32[16,1], index: 4, kind: input, shape index: {}]
  %s5 = inlined_call_operand.vmem [shape: f32[2,128,128], index: 5, kind: input, shape index: {}]
  %s6 = inlined_call_operand.vmem [shape: f32[384,128], index: 6, kind: input, shape index: {}]
  %s7 = inlined_call_operand.vmem [shape: f32[256,128], index: 7, kind: input, shape index: {}]
  %s8 = inlined_call_operand.vmem [shape: f32[256,128], index: 8, kind: input, shape index: {}]
  %s9 = inlined_call_operand.vmem [shape: f32[2,128,128], index: 9, kind: input, shape index: {}]
  %s10 = inlined_call_operand.vmem [shape: f32[8,128], index: 10, kind: input, shape index: {}]
  %s11 = inlined_call_operand.vmem [shape: f32[8,128], index: 11, kind: input, shape index: {}]
  %s12 = inlined_call_operand.hbm [shape: f32[16,128], index: 12, kind: output, shape index: {0}]
  %s13 = inlined_call_operand.vmem [shape: f32[64,128], index: 13, kind: output, shape index: {1}]
  %14 = xla_tuple %s12, %s13
  %s15 = sld [smem:[#allocation0]]
  $region97: #{resblock_forward.1} parent=0
    _
  %s17 = ssub.s32 1, %s15
  %s18 = scalar_select 0, %s17, %s15
  $region1: #{resblock_forward.1} parent=0
    #allocation4 [shape = 'u8[8192]{0}', space=vmem, size = 0x2000, scoped, tag = 'output window, operand 0, single buffered']
    #allocation5 [shape = 's32[2]{0}', space=sflag, size = 0x8, scoped, tag = 'scoped memory for resblock_forward.1']
    %19 = vsyncpa [#allocation5], 0
    loop: start=0, step=1, limit=4
    $region2: #{resblock_forward.1} parent=1 // loop_pre_header
      _
    $region3: #{resblock_forward.1} parent=1 // loop_header
      %s21 = sphi 0, %s25
      %p22 = scmp.ge.s32.totalorder %s21, 4
      %s31 = sphi 0, %s33
      %s34 = sphi 0, %s31
      %s35 = sphi 0, %s34
      %s51 = sphi 0, %s35
      %s57 = sphi 0, %s59
      %s60 = sphi 0, %s57
      %s61 = sphi 0, %s60
      %s77 = sphi 0, %s61
      %s81 = sphi 0, %s81
      %s83 = sphi 0, %s81
      %s84 = sphi 0, %s83
      %s98 = sphi 0, %s84
      %s104 = sphi 0, %s106
      %s107 = sphi 0, %s104
      %s108 = sphi 0, %s107
      %s124 = sphi 0, %s108
      %s128 = sphi 0, %s128
      %s130 = sphi 0, %s128
      %s131 = sphi 0, %s130
      %s145 = sphi 0, %s131
      %s149 = sphi 0, %s149
      %s151 = sphi 0, %s149
      %s152 = sphi 0, %s151
      %s166 = sphi 0, %s152
      %s170 = sphi 0, %s170
      %s172 = sphi 0, %s170
      %s173 = sphi 0, %s172
      %s187 = sphi 0, %s173
      %s191 = sphi 0, %s191
      %s193 = sphi 0, %s191
      %s194 = sphi 0, %s193
      %s208 = sphi 0, %s194
      %s212 = sphi 0, %s212
      %s214 = sphi 0, %s212
      %s215 = sphi 0, %s214
      %s229 = sphi 0, %s215
      %s233 = sphi 0, %s233
      %s235 = sphi 0, %s233
      %s236 = sphi 0, %s235
      %s250 = sphi 0, %s236
      %s254 = sphi 0, %s254
      %s256 = sphi 0, %s254
      %s257 = sphi 0, %s256
      %s271 = sphi 0, %s257
      %s275 = sphi 0, %s275
      %s277 = sphi 0, %s275
      %s278 = sphi 0, %s277
      %s292 = sphi 0, %s278
      %s296 = sphi 0, %s296
      %s298 = sphi 0, %s296
      %s299 = sphi 0, %s298
      %s313 = sphi 0, %s299
      %s319 = sphi 0, %s321
      %s322 = sphi 0, %s319
      %s323 = sphi 0, %s322
      %s339 = sphi 0, %s323
    $region4: #{resblock_forward.1} parent=1 // loop_header_branch
      %24 = sbr.rel (%p22) target = $region8
    $region5: #{resblock_forward.1} parent=1 // loop_body
      %s26 = ssub.s32 %s21, 1
      %s27 = ssub.s32 %s21, 2
      %s28 = sadd.s32 %s21, 1
      %s29 = ssub.s32 %s21, %s28
      %p30 = scmp.eq.s32.totalorder %s29, 0
      %s32 = sadd.s32 %s31, 1
      %s33 = scalar_select %p30, %s31, %s32
      %p36 = pneg %p30
      %p37 = scmp.eq.s32.totalorder %s21, 1
      %p38 = por %p36, %p37
      %p39 = scmp.ne.s32.totalorder %s31, %s34
      %p40 = scmp.eq.s32.totalorder %s21, 0
      %p41 = por %p39, %p40
      %p42 = scmp.ne.s32.totalorder %s31, %s34
      %p43 = scmp.eq.s32.totalorder %s26, 1
      %p44 = por %p42, %p43
      %p45 = scmp.ne.s32.totalorder %s34, %s35
      %p46 = scmp.eq.s32.totalorder %s26, 0
      %p47 = por %p45, %p46
      %p48 = scmp.ne.s32.totalorder %s34, %s35
      %p49 = scmp.eq.s32.totalorder %s27, 1
      %p50 = por %p48, %p49
      %p52 = scmp.ne.s32.totalorder %s35, %s51
      %p53 = scmp.eq.s32.totalorder %s27, 0
      %p54 = por %p52, %p53
      %s55 = ssub.s32 %s21, %s28
      %p56 = scmp.eq.s32.totalorder %s55, 0
      %s58 = sadd.s32 %s57, 1
      %s59 = scalar_select %p56, %s57, %s58
      %p62 = pneg %p56
      %p63 = scmp.eq.s32.totalorder %s21, 1
      %p64 = por %p62, %p63
      %p65 = scmp.ne.s32.totalorder %s57, %s60
      %p66 = scmp.eq.s32.totalorder %s21, 0
      %p67 = por %p65, %p66
      %p68 = scmp.ne.s32.totalorder %s57, %s60
      %p69 = scmp.eq.s32.totalorder %s26, 1
      %p70 = por %p68, %p69
      %p71 = scmp.ne.s32.totalorder %s60, %s61
      %p72 = scmp.eq.s32.totalorder %s26, 0
      %p73 = por %p71, %p72
      %p74 = scmp.ne.s32.totalorder %s60, %s61
      %p75 = scmp.eq.s32.totalorder %s27, 1
      %p76 = por %p74, %p75
      %p78 = scmp.ne.s32.totalorder %s61, %s77
      %p79 = scmp.eq.s32.totalorder %s27, 0
      %p80 = por %p78, %p79
      %s82 = sadd.s32 %s81, 1
      %p85 = scmp.eq.s32.totalorder %s21, 1
      %p86 = scmp.ne.s32.totalorder %s81, %s83
      %p87 = scmp.eq.s32.totalorder %s21, 0
      %p88 = por %p86, %p87
      %p89 = scmp.ne.s32.totalorder %s81, %s83
      %p90 = scmp.eq.s32.totalorder %s26, 1
      %p91 = por %p89, %p90
      %p92 = scmp.ne.s32.totalorder %s83, %s84
      %p93 = scmp.eq.s32.totalorder %s26, 0
      %p94 = por %p92, %p93
      %p95 = scmp.ne.s32.totalorder %s83, %s84
      %p96 = scmp.eq.s32.totalorder %s27, 1
      %p97 = por %p95, %p96
      %p99 = scmp.ne.s32.totalorder %s84, %s98
      %p100 = scmp.eq.s32.totalorder %s27, 0
      %p101 = por %p99, %p100
      %s102 = ssub.s32 %s21, %s28
      %p103 = scmp.eq.s32.totalorder %s102, 0
      %s105 = sadd.s32 %s104, 1
      %s106 = scalar_select %p103, %s104, %s105
      %p109 = pneg %p103
      %p110 = scmp.eq.s32.totalorder %s21, 1
      %p111 = por %p109, %p110
      %p112 = scmp.ne.s32.totalorder %s104, %s107
      %p113 = scmp.eq.s32.totalorder %s21, 0
      %p114 = por %p112, %p113
      %p115 = scmp.ne.s32.totalorder %s104, %s107
      %p116 = scmp.eq.s32.totalorder %s26, 1
      %p117 = por %p115, %p116
      %p118 = scmp.ne.s32.totalorder %s107, %s108
      %p119 = scmp.eq.s32.totalorder %s26, 0
      %p120 = por %p118, %p119
      %p121 = scmp.ne.s32.totalorder %s107, %s108
      %p122 = scmp.eq.s32.totalorder %s27, 1
      %p123 = por %p121, %p122
      %p125 = scmp.ne.s32.totalorder %s108, %s124
      %p126 = scmp.eq.s32.totalorder %s27, 0
      %p127 = por %p125, %p126
      %s129 = sadd.s32 %s128, 1
      %p132 = scmp.eq.s32.totalorder %s21, 1
      %p133 = scmp.ne.s32.totalorder %s128, %s130
      %p134 = scmp.eq.s32.totalorder %s21, 0
      %p135 = por %p133, %p134
      %p136 = scmp.ne.s32.totalorder %s128, %s130
      %p137 = scmp.eq.s32.totalorder %s26, 1
      %p138 = por %p136, %p137
      %p139 = scmp.ne.s32.totalorder %s130, %s131
      %p140 = scmp.eq.s32.totalorder %s26, 0
      %p141 = por %p139, %p140
      %p142 = scmp.ne.s32.totalorder %s130, %s131
      %p143 = scmp.eq.s32.totalorder %s27, 1
      %p144 = por %p142, %p143
      %p146 = scmp.ne.s32.totalorder %s131, %s145
      %p147 = scmp.eq.s32.totalorder %s27, 0
      %p148 = por %p146, %p147
      %s150 = sadd.s32 %s149, 1
      %p153 = scmp.eq.s32.totalorder %s21, 1
      %p154 = scmp.ne.s32.totalorder %s149, %s151
      %p155 = scmp.eq.s32.totalorder %s21, 0
      %p156 = por %p154, %p155
      %p157 = scmp.ne.s32.totalorder %s149, %s151
      %p158 = scmp.eq.s32.totalorder %s26, 1
      %p159 = por %p157, %p158
      %p160 = scmp.ne.s32.totalorder %s151, %s152
      %p161 = scmp.eq.s32.totalorder %s26, 0
      %p162 = por %p160, %p161
      %p163 = scmp.ne.s32.totalorder %s151, %s152
      %p164 = scmp.eq.s32.totalorder %s27, 1
      %p165 = por %p163, %p164
      %p167 = scmp.ne.s32.totalorder %s152, %s166
      %p168 = scmp.eq.s32.totalorder %s27, 0
      %p169 = por %p167, %p168
      %s171 = sadd.s32 %s170, 1
      %p174 = scmp.eq.s32.totalorder %s21, 1
      %p175 = scmp.ne.s32.totalorder %s170, %s172
      %p176 = scmp.eq.s32.totalorder %s21, 0
      %p177 = por %p175, %p176
      %p178 = scmp.ne.s32.totalorder %s170, %s172
      %p179 = scmp.eq.s32.totalorder %s26, 1
      %p180 = por %p178, %p179
      %p181 = scmp.ne.s32.totalorder %s172, %s173
      %p182 = scmp.eq.s32.totalorder %s26, 0
      %p183 = por %p181, %p182
      %p184 = scmp.ne.s32.totalorder %s172, %s173
      %p185 = scmp.eq.s32.totalorder %s27, 1
      %p186 = por %p184, %p185
      %p188 = scmp.ne.s32.totalorder %s173, %s187
      %p189 = scmp.eq.s32.totalorder %s27, 0
      %p190 = por %p188, %p189
      %s192 = sadd.s32 %s191, 1
      %p195 = scmp.eq.s32.totalorder %s21, 1
      %p196 = scmp.ne.s32.totalorder %s191, %s193
      %p197 = scmp.eq.s32.totalorder %s21, 0
      %p198 = por %p196, %p197
      %p199 = scmp.ne.s32.totalorder %s191, %s193
      %p200 = scmp.eq.s32.totalorder %s26, 1
      %p201 = por %p199, %p200
      %p202 = scmp.ne.s32.totalorder %s193, %s194
      %p203 = scmp.eq.s32.totalorder %s26, 0
      %p204 = por %p202, %p203
      %p205 = scmp.ne.s32.totalorder %s193, %s194
      %p206 = scmp.eq.s32.totalorder %s27, 1
      %p207 = por %p205, %p206
      %p209 = scmp.ne.s32.totalorder %s194, %s208
      %p210 = scmp.eq.s32.totalorder %s27, 0
      %p211 = por %p209, %p210
      %s213 = sadd.s32 %s212, 1
      %p216 = scmp.eq.s32.totalorder %s21, 1
      %p217 = scmp.ne.s32.totalorder %s212, %s214
      %p218 = scmp.eq.s32.totalorder %s21, 0
      %p219 = por %p217, %p218
      %p220 = scmp.ne.s32.totalorder %s212, %s214
      %p221 = scmp.eq.s32.totalorder %s26, 1
      %p222 = por %p220, %p221
      %p223 = scmp.ne.s32.totalorder %s214, %s215
      %p224 = scmp.eq.s32.totalorder %s26, 0
      %p225 = por %p223, %p224
      %p226 = scmp.ne.s32.totalorder %s214, %s215
      %p227 = scmp.eq.s32.totalorder %s27, 1
      %p228 = por %p226, %p227
      %p230 = scmp.ne.s32.totalorder %s215, %s229
      %p231 = scmp.eq.s32.totalorder %s27, 0
      %p232 = por %p230, %p231
      %s234 = sadd.s32 %s233, 1
      %p237 = scmp.eq.s32.totalorder %s21, 1
      %p238 = scmp.ne.s32.totalorder %s233, %s235
      %p239 = scmp.eq.s32.totalorder %s21, 0
      %p240 = por %p238, %p239
      %p241 = scmp.ne.s32.totalorder %s233, %s235
      %p242 = scmp.eq.s32.totalorder %s26, 1
      %p243 = por %p241, %p242
      %p244 = scmp.ne.s32.totalorder %s235, %s236
      %p245 = scmp.eq.s32.totalorder %s26, 0
      %p246 = por %p244, %p245
      %p247 = scmp.ne.s32.totalorder %s235, %s236
      %p248 = scmp.eq.s32.totalorder %s27, 1
      %p249 = por %p247, %p248
      %p251 = scmp.ne.s32.totalorder %s236, %s250
      %p252 = scmp.eq.s32.totalorder %s27, 0
      %p253 = por %p251, %p252
      %s255 = sadd.s32 %s254, 1
      %p258 = scmp.eq.s32.totalorder %s21, 1
      %p259 = scmp.ne.s32.totalorder %s254, %s256
      %p260 = scmp.eq.s32.totalorder %s21, 0
      %p261 = por %p259, %p260
      %p262 = scmp.ne.s32.totalorder %s254, %s256
      %p263 = scmp.eq.s32.totalorder %s26, 1
      %p264 = por %p262, %p263
      %p265 = scmp.ne.s32.totalorder %s256, %s257
      %p266 = scmp.eq.s32.totalorder %s26, 0
      %p267 = por %p265, %p266
      %p268 = scmp.ne.s32.totalorder %s256, %s257
      %p269 = scmp.eq.s32.totalorder %s27, 1
      %p270 = por %p268, %p269
      %p272 = scmp.ne.s32.totalorder %s257, %s271
      %p273 = scmp.eq.s32.totalorder %s27, 0
      %p274 = por %p272, %p273
      %s276 = sadd.s32 %s275, 1
      %p279 = scmp.eq.s32.totalorder %s21, 1
      %p280 = scmp.ne.s32.totalorder %s275, %s277
      %p281 = scmp.eq.s32.totalorder %s21, 0
      %p282 = por %p280, %p281
      %p283 = scmp.ne.s32.totalorder %s275, %s277
      %p284 = scmp.eq.s32.totalorder %s26, 1
      %p285 = por %p283, %p284
      %p286 = scmp.ne.s32.totalorder %s277, %s278
      %p287 = scmp.eq.s32.totalorder %s26, 0
      %p288 = por %p286, %p287
      %p289 = scmp.ne.s32.totalorder %s277, %s278
      %p290 = scmp.eq.s32.totalorder %s27, 1
      %p291 = por %p289, %p290
      %p293 = scmp.ne.s32.totalorder %s278, %s292
      %p294 = scmp.eq.s32.totalorder %s27, 0
      %p295 = por %p293, %p294
      %s297 = sadd.s32 %s296, 1
      %p300 = scmp.eq.s32.totalorder %s21, 1
      %p301 = scmp.ne.s32.totalorder %s296, %s298
      %p302 = scmp.eq.s32.totalorder %s21, 0
      %p303 = por %p301, %p302
      %p304 = scmp.ne.s32.totalorder %s296, %s298
      %p305 = scmp.eq.s32.totalorder %s26, 1
      %p306 = por %p304, %p305
      %p307 = scmp.ne.s32.totalorder %s298, %s299
      %p308 = scmp.eq.s32.totalorder %s26, 0
      %p309 = por %p307, %p308
      %p310 = scmp.ne.s32.totalorder %s298, %s299
      %p311 = scmp.eq.s32.totalorder %s27, 1
      %p312 = por %p310, %p311
      %p314 = scmp.ne.s32.totalorder %s299, %s313
      %p315 = scmp.eq.s32.totalorder %s27, 0
      %p316 = por %p314, %p315
      %s317 = ssub.s32 %s21, %s28
      %p318 = scmp.eq.s32.totalorder %s317, 0
      %s320 = sadd.s32 %s319, 1
      %s321 = scalar_select %p318, %s319, %s320
      %p324 = pneg %p318
      %p325 = scmp.eq.s32.totalorder %s21, 1
      %p326 = por %p324, %p325
      %p327 = scmp.ne.s32.totalorder %s319, %s322
      %p328 = scmp.eq.s32.totalorder %s21, 0
      %p329 = por %p327, %p328
      %p330 = scmp.ne.s32.totalorder %s319, %s322
      %p331 = scmp.eq.s32.totalorder %s26, 1
      %p332 = por %p330, %p331
      %p333 = scmp.ne.s32.totalorder %s322, %s323
      %p334 = scmp.eq.s32.totalorder %s26, 0
      %p335 = por %p333, %p334
      %p336 = scmp.ne.s32.totalorder %s322, %s323
      %p337 = scmp.eq.s32.totalorder %s27, 1
      %p338 = por %p336, %p337
      %p340 = scmp.ne.s32.totalorder %s323, %s339
      %p341 = scmp.eq.s32.totalorder %s27, 0
      %p342 = por %p340, %p341
      %p343 = scmp.le.s32.totalorder 1, %s21
      %p344 = scmp.lt.s32.totalorder %s21, 3
      %p345 = pnand %p343, %p344
      %p346 = pneg %p345
      // Predicated region
      $region9: #{resblock_forward.1} parent=5 // pred_check
        _
      $region10: #{resblock_forward.1} parent=5 // pred_check_branch
        %348 = sbr.rel (%p345) target = $region12
      $region11: #{resblock_forward.1} parent=5 // pred_region
        %s349 = ssub.s32 %s21, 1
        // Predicated region
        $region13: #{resblock_forward.1} parent=11 // pred_check
          %p350 = pneg %p94
        $region14: #{resblock_forward.1} parent=11 // pred_check_branch
          %352 = sbr.rel (%p350) target = $region16
        $region15: #{resblock_forward.1} parent=11 // pred_region
          _
        $region16: #{resblock_forward.1} parent=11 // pred_fallthru
          _
        // Predicated region
        $region17: #{resblock_forward.1} parent=11 // pred_check
          %p353 = pneg %p141
        $region18: #{resblock_forward.1} parent=11 // pred_check_branch
          %355 = sbr.rel (%p353) target = $region20
        $region19: #{resblock_forward.1} parent=11 // pred_region
          _
        $region20: #{resblock_forward.1} parent=11 // pred_fallthru
          _
        // Predicated region
        $region21: #{resblock_forward.1} parent=11 // pred_check
          %p356 = pneg %p162
        $region22: #{resblock_forward.1} parent=11 // pred_check_branch
          %358 = sbr.rel (%p356) target = $region24
        $region23: #{resblock_forward.1} parent=11 // pred_region
          _
        $region24: #{resblock_forward.1} parent=11 // pred_fallthru
          _
        // Predicated region
        $region25: #{resblock_forward.1} parent=11 // pred_check
          %p359 = pneg %p183
        $region26: #{resblock_forward.1} parent=11 // pred_check_branch
          %361 = sbr.rel (%p359) target = $region28
        $region27: #{resblock_forward.1} parent=11 // pred_region
          _
        $region28: #{resblock_forward.1} parent=11 // pred_fallthru
          _
        // Predicated region
        $region29: #{resblock_forward.1} parent=11 // pred_check
          %p362 = pneg %p204
        $region30: #{resblock_forward.1} parent=11 // pred_check_branch
          %364 = sbr.rel (%p362) target = $region32
        $region31: #{resblock_forward.1} parent=11 // pred_region
          _
        $region32: #{resblock_forward.1} parent=11 // pred_fallthru
          _
        // Predicated region
        $region33: #{resblock_forward.1} parent=11 // pred_check
          %p365 = pneg %p225
        $region34: #{resblock_forward.1} parent=11 // pred_check_branch
          %367 = sbr.rel (%p365) target = $region36
        $region35: #{resblock_forward.1} parent=11 // pred_region
          _
        $region36: #{resblock_forward.1} parent=11 // pred_fallthru
          _
        // Predicated region
        $region37: #{resblock_forward.1} parent=11 // pred_check
          %p368 = pneg %p246
        $region38: #{resblock_forward.1} parent=11 // pred_check_branch
          %370 = sbr.rel (%p368) target = $region40
        $region39: #{resblock_forward.1} parent=11 // pred_region
          _
        $region40: #{resblock_forward.1} parent=11 // pred_fallthru
          _
        // Predicated region
        $region41: #{resblock_forward.1} parent=11 // pred_check
          %p371 = pneg %p267
        $region42: #{resblock_forward.1} parent=11 // pred_check_branch
          %373 = sbr.rel (%p371) target = $region44
        $region43: #{resblock_forward.1} parent=11 // pred_region
          _
        $region44: #{resblock_forward.1} parent=11 // pred_fallthru
          _
        // Predicated region
        $region45: #{resblock_forward.1} parent=11 // pred_check
          %p374 = pneg %p288
        $region46: #{resblock_forward.1} parent=11 // pred_check_branch
          %376 = sbr.rel (%p374) target = $region48
        $region47: #{resblock_forward.1} parent=11 // pred_region
          _
        $region48: #{resblock_forward.1} parent=11 // pred_fallthru
          _
      $region12: #{resblock_forward.1} parent=5 // pred_fallthru
        _
      %p377 = scmp.lt.s32.totalorder %s21, 2
      // Predicated region
      $region49: #{resblock_forward.1} parent=5 // pred_check
        %p378 = pneg %p377
      $region50: #{resblock_forward.1} parent=5 // pred_check_branch
        %380 = sbr.rel (%p378) target = $region52
      $region51: #{resblock_forward.1} parent=5 // pred_region
        // Predicated region
        $region53: #{resblock_forward.1} parent=51 // pred_check
          %p381 = pneg %p41
        $region54: #{resblock_forward.1} parent=51 // pred_check_branch
          %383 = sbr.rel (%p381) target = $region56
        $region55: #{resblock_forward.1} parent=51 // pred_region
          %s384 = smul.u32 4, %s21
          %p385 = scmp.lt.s32.totalorder %s384, 7
          %s386 = scalar_select %p385, %s384, 7
          %s387 = smul.addr %s386, 8
          %s388 = scalar_lea.vmem %s0, %s387
          %s389 = smul.u32 4, %s21
        $region56: #{resblock_forward.1} parent=51 // pred_fallthru
          _
        // Predicated region
        $region57: #{resblock_forward.1} parent=51 // pred_check
          %p390 = pneg %p67
        $region58: #{resblock_forward.1} parent=51 // pred_check_branch
          %392 = sbr.rel (%p390) target = $region60
        $region59: #{resblock_forward.1} parent=51 // pred_region
          %s393 = smul.u32 4, %s21
          %p394 = scmp.lt.s32.totalorder %s393, 7
          %s395 = scalar_select %p394, %s393, 7
          %s396 = smul.addr %s395, 8
          %s397 = scalar_lea.vmem %s1, %s396
          %s398 = smul.u32 4, %s21
        $region60: #{resblock_forward.1} parent=51 // pred_fallthru
          _
        // Predicated region
        $region61: #{resblock_forward.1} parent=51 // pred_check
          %p399 = pneg %p114
        $region62: #{resblock_forward.1} parent=51 // pred_check_branch
          %401 = sbr.rel (%p399) target = $region64
        $region63: #{resblock_forward.1} parent=51 // pred_region
          %s402 = smul.u32 4, %s21
          %p403 = scmp.lt.s32.totalorder %s402, 7
          %s404 = scalar_select %p403, %s402, 7
          %s405 = smul.addr %s404, 8
          %s406 = scalar_lea.vmem %s3, %s405
          %s407 = smul.u32 4, %s21
        $region64: #{resblock_forward.1} parent=51 // pred_fallthru
          _
      $region52: #{resblock_forward.1} parent=5 // pred_fallthru
        _
      %p408 = scmp.le.s32.totalorder 1, %s21
      %p409 = scmp.lt.s32.totalorder %s21, 3
      %p410 = pnand %p408, %p409
      %p411 = pneg %p410
      // Predicated region
      $region65: #{resblock_forward.1} parent=5 // pred_check
        _
      $region66: #{resblock_forward.1} parent=5 // pred_check_branch
        %413 = sbr.rel (%p410) target = $region68
      $region67: #{resblock_forward.1} parent=5 // pred_region
        %s414 = ssub.s32 %s21, 1
        %s415 = smul.u32 4, %s26
        %p416 = scmp.lt.s32.totalorder %s415, 7
        %s417 = scalar_select %p416, %s415, 7
        %s418 = smul.addr %s417, 8
        %s419 = scalar_lea.vmem %s0, %s418
        %p420 = pneg %p47
        %p421 = pneg %p44
        %s422 = smul.u32 4, %s26
        %p423 = scmp.lt.s32.totalorder %s422, 7
        %s424 = scalar_select %p423, %s422, 7
        %s425 = smul.addr %s424, 8
        %s426 = scalar_lea.vmem %s1, %s425
        %p427 = pneg %p73
        %p428 = pneg %p70
        %p429 = pneg %p94
        %p430 = pneg %p91
        %s431 = smul.u32 4, %s26
        %p432 = scmp.lt.s32.totalorder %s431, 7
        %s433 = scalar_select %p432, %s431, 7
        %s434 = smul.addr %s433, 8
        %s435 = scalar_lea.vmem %s3, %s434
        %p436 = pneg %p120
        %p437 = pneg %p117
        %p438 = pneg %p141
        %p439 = pneg %p138
        %p440 = pneg %p162
        %p441 = pneg %p159
        %p442 = pneg %p183
        %p443 = pneg %p180
        %p444 = pneg %p204
        %p445 = pneg %p201
        %p446 = pneg %p225
        %p447 = pneg %p222
        %p448 = pneg %p246
        %p449 = pneg %p243
        %p450 = pneg %p267
        %p451 = pneg %p264
        %p452 = pneg %p288
        %p453 = pneg %p285
        %p454 = pneg %p309
        %p455 = pneg %p306
        %p456 = pneg %p335
        %p457 = pneg %p332
        %s458 = smul.u32 4, %s26
        %p459 = scmp.lt.s32.totalorder %s458, 7
        %s460 = scalar_select %p459, %s458, 7
        %s461 = smul.addr %s460, 8
        %s462 = scalar_lea.vmem %s13, %s461
        %s463 = smul.u32 4, %s26
        %p464 = scmp.lt.s32.totalorder %s463, 7
        %s465 = scalar_select %p464, %s463, 7
        %s466 = smul.addr %s465, 8
        %s467 = scalar_lea.vmem %s0, %s466
        %s468 = smul.u32 4, %s26
        %s469 = smul.u32 4, %s26
        %p470 = scmp.lt.s32.totalorder %s469, 7
        %s471 = scalar_select %p470, %s469, 7
        %s472 = smul.addr %s471, 8
        %s473 = scalar_lea.vmem %s1, %s472
        %s474 = smul.u32 4, %s26
        %s475 = smul.u32 4, %s26
        %p476 = scmp.lt.s32.totalorder %s475, 7
        %s477 = scalar_select %p476, %s475, 7
        %s478 = smul.addr %s477, 8
        %s479 = scalar_lea.vmem %s3, %s478
        %s480 = smul.u32 4, %s26
        %s481 = smul.u32 4, %s26
        %p482 = scmp.lt.s32.totalorder %s481, 7
        %s483 = scalar_select %p482, %s481, 7
        %s484 = smul.addr %s483, 8
        %s485 = scalar_lea.vmem %s13, %s484
        %s486 = smul.u32 4, %s26
        %p487 = scmp.eq.s32.totalorder %s26, 0
        // Predicated region
        $region69: #{resblock_forward.1} parent=67 // pred_check
          %p488 = pneg %p487
        $region70: #{resblock_forward.1} parent=67 // pred_check_branch
          %490 = sbr.rel (%p488) target = $region72
        $region71: #{resblock_forward.1} parent=67 // pred_region
          %v491 = vld [vmem:[%s2] sm:$0xff]
          %v492 = vld [vmem:[%s2 + $0x8] sm:$0xff]
          %v493 = vld [vmem:[%s5] sm:$0xff]
          %v494 = vld [vmem:[%s5 + $0x8] sm:$0xff]
          %v495 = vld [vmem:[%s5 + $0x10] sm:$0xff]
          %v496 = vld [vmem:[%s5 + $0x18] sm:$0xff]
          %v497 = vld [vmem:[%s5 + $0x20] sm:$0xff]
          %v498 = vld [vmem:[%s5 + $0x28] sm:$0xff]
          %v499 = vld [vmem:[%s5 + $0x30] sm:$0xff]
          %v500 = vld [vmem:[%s5 + $0x38] sm:$0xff]
          %v501 = vld [vmem:[%s5 + $0x40] sm:$0xff]
          %v502 = vld [vmem:[%s5 + $0x48] sm:$0xff]
          %v503 = vld [vmem:[%s5 + $0x50] sm:$0xff]
          %v504 = vld [vmem:[%s5 + $0x58] sm:$0xff]
          %v505 = vld [vmem:[%s5 + $0x60] sm:$0xff]
          %v506 = vld [vmem:[%s5 + $0x68] sm:$0xff]
          %v507 = vld [vmem:[%s5 + $0x70] sm:$0xff]
          %v508 = vld [vmem:[%s5 + $0x78] sm:$0xff]
          %v509 = vld [vmem:[%s10] sm:$0x1]
          %v510 = vlaneseq
          %v511 = vshrl.u32 %v510, 7
          %v512 = vsub.s32 0, %v511
          %v513 = vrot.slane %v509, %v512
          %514 = vmatprep.subr.mxu0 0.0
          %515 = vmatpush1.msra.mxu0 %v508
          %516 = vmatprep.subr.mxu0 0.0
          %517 = vmatpush1.msra.mxu0 %v507
          %518 = vmatprep.subr.mxu0 0.0
          %519 = vmatpush1.msra.mxu0 %v506
          %520 = vmatprep.subr.mxu0 0.0
          %521 = vmatpush1.msra.mxu0 %v505
          %522 = vmatprep.subr.mxu0 0.0
          %523 = vmatpush1.msra.mxu0 %v504
          %524 = vmatprep.subr.mxu0 0.0
          %525 = vmatpush1.msra.mxu0 %v503
          %526 = vmatprep.subr.mxu0 0.0
          %527 = vmatpush1.msra.mxu0 %v502
          %528 = vmatprep.subr.mxu0 0.0
          %529 = vmatpush1.msra.mxu0 %v501
          %530 = vmatprep.subr.mxu0 0.0
          %531 = vmatpush1.msra.mxu0 %v500
          %532 = vmatprep.subr.mxu0 0.0
          %533 = vmatpush1.msra.mxu0 %v499
          %534 = vmatprep.subr.mxu0 0.0
          %535 = vmatpush1.msra.mxu0 %v498
          %536 = vmatprep.subr.mxu0 0.0
          %537 = vmatpush1.msra.mxu0 %v497
          %538 = vmatprep.subr.mxu0 0.0
          %539 = vmatpush1.msra.mxu0 %v496
          %540 = vmatprep.subr.mxu0 0.0
          %541 = vmatpush1.msra.mxu0 %v495
          %542 = vmatprep.subr.mxu0 0.0
          %543 = vmatpush1.msra.mxu0 %v494
          %544 = vmatprep.subr.mxu0 0.0
          %545 = vmatpush1.msra.mxu0 %v493
          %546 = vmatprep.subr.mxu0 0.0
          %547 = vmatpush2.msra.mxu0 0.0
          %548 = vmatprep.subr.mxu0 0.0
          %549 = vmatpush2.msra.mxu0 0.0
          %550 = vmatprep.subr.mxu0 0.0
          %551 = vmatpush2.msra.mxu0 0.0
          %552 = vmatprep.subr.mxu0 0.0
          %553 = vmatpush2.msra.mxu0 0.0
          %554 = vmatprep.subr.mxu0 0.0
          %555 = vmatpush2.msra.mxu0 0.0
          %556 = vmatprep.subr.mxu0 0.0
          %557 = vmatpush2.msra.mxu0 0.0
          %558 = vmatprep.subr.mxu0 0.0
          %559 = vmatpush2.msra.mxu0 0.0
          %560 = vmatprep.subr.mxu0 0.0
          %561 = vmatpush2.msra.mxu0 0.0
          %562 = vmatprep.subr.mxu0 0.0
          %563 = vmatpush2.msra.mxu0 0.0
          %564 = vmatprep.subr.mxu0 0.0
          %565 = vmatpush2.msra.mxu0 0.0
          %566 = vmatprep.subr.mxu0 0.0
          %567 = vmatpush2.msra.mxu0 0.0
          %568 = vmatprep.subr.mxu0 0.0
          %569 = vmatpush2.msra.mxu0 0.0
          %570 = vmatprep.subr.mxu0 0.0
          %571 = vmatpush2.msra.mxu0 0.0
          %572 = vmatprep.subr.mxu0 0.0
          %573 = vmatpush2.msra.mxu0 0.0
          %574 = vmatprep.subr.mxu0 0.0
          %575 = vmatpush2.msra.mxu0 0.0
          %576 = vmatprep.subr.mxu0 0.0
          %577 = vmatpush2.msra.mxu0 0.0
          %578 = vmatprep.mubr.f32.mxu0 0.0
          %579 = vmatmul.mubr.f32.gmra.mxu0 %v491
          %v580 = vpop.f32.mrf.mxu0
          %v581 = vadd.f32 %v513, %v580
          %v582 = vpop.f32.mrf.mxu0
          %583 = vmatprep.mubr.f32.mxu0 0.0
          %584 = vmatmul.mubr.f32.gmra.mxu0 %v492
          %v585 = vpop.f32.mrf.mxu0
          %v586 = vadd.f32 %v513, %v585
          %v587 = vpop.f32.mrf.mxu0
          %588 = vdwg.mxu0
          %vm589 = vcmp.gt.f32.partialorder %v581, 0.0
          %vm590 = vcmp.gt.f32.partialorder %v586, 0.0
          %v591 = vmin.f32 %v581, 0.0
          %v592 = vmin.f32 %v586, 0.0
          %v593 = vmul.f32 %v591, 1.442695
          %v594 = vpow.pop %v593
          %v595 = vmul.f32 %v592, 1.442695
          %v596 = vpow.pop %v595
          %v597 = vsub.f32 %v594, 1.0
          %v598 = vsub.f32 %v596, 1.0
          %v599 = vsel %vm589, %v581, %v597
          %v600 = vsel %vm590, %v586, %v598
          %601 = vst [vmem:[#allocation2] sm:$0xff] %v599
          %602 = vst [vmem:[#allocation2 + $0x8] sm:$0xff] %v600
          %603 = vst [vmem:[#allocation3] sm:$0xff] 0.0
          %604 = vst [vmem:[#allocation3 + $0x8] sm:$0xff] 0.0
        $region72: #{resblock_forward.1} parent=67 // pred_fallthru
          _
        %v605 = vld [vmem:[%s479] sm:$0xff]
        %v606 = vld [vmem:[%s479 + $0x8] sm:$0xff]
        %v607 = vld [vmem:[%s479 + $0x10] sm:$0xff]
        %v608 = vld [vmem:[%s479 + $0x18] sm:$0xff]
        %s609 = scalar_lea.vmem %s5, 128
        %v610 = vld [vmem:[%s609] sm:$0xff]
        %v611 = vld [vmem:[%s609 + $0x8] sm:$0xff]
        %v612 = vld [vmem:[%s609 + $0x10] sm:$0xff]
        %v613 = vld [vmem:[%s609 + $0x18] sm:$0xff]
        %v614 = vld [vmem:[%s609 + $0x20] sm:$0xff]
        %v615 = vld [vmem:[%s609 + $0x28] sm:$0xff]
        %v616 = vld [vmem:[%s609 + $0x30] sm:$0xff]
        %v617 = vld [vmem:[%s609 + $0x38] sm:$0xff]
        %v618 = vld [vmem:[%s609 + $0x40] sm:$0xff]
        %v619 = vld [vmem:[%s609 + $0x48] sm:$0xff]
        %v620 = vld [vmem:[%s609 + $0x50] sm:$0xff]
        %v621 = vld [vmem:[%s609 + $0x58] sm:$0xff]
        %v622 = vld [vmem:[%s609 + $0x60] sm:$0xff]
        %v623 = vld [vmem:[%s609 + $0x68] sm:$0xff]
        %v624 = vld [vmem:[%s609 + $0x70] sm:$0xff]
        %v625 = vld [vmem:[%s609 + $0x78] sm:$0xff]
        %v626 = vld [vmem:[%s10 + $0x1] sm:$0x1]
        %v627 = vlaneseq
        %v628 = vshrl.u32 %v627, 7
        %v629 = vsub.s32 0, %v628
        %v630 = vrot.slane %v626, %v629
        %631 = vmatprep.subr.mxu0 0.0
        %632 = vmatpush1.msra.mxu0 %v625
        %633 = vmatprep.subr.mxu0 0.0
        %634 = vmatpush1.msra.mxu0 %v624
        %635 = vmatprep.subr.mxu0 0.0
        %636 = vmatpush1.msra.mxu0 %v623
        %637 = vmatprep.subr.mxu0 0.0
        %638 = vmatpush1.msra.mxu0 %v622
        %639 = vmatprep.subr.mxu0 0.0
        %640 = vmatpush1.msra.mxu0 %v621
        %641 = vmatprep.subr.mxu0 0.0
        %642 = vmatpush1.msra.mxu0 %v620
        %643 = vmatprep.subr.mxu0 0.0
        %644 = vmatpush1.msra.mxu0 %v619
        %645 = vmatprep.subr.mxu0 0.0
        %646 = vmatpush1.msra.mxu0 %v618
        %647 = vmatprep.subr.mxu0 0.0
        %648 = vmatpush1.msra.mxu0 %v617
        %649 = vmatprep.subr.mxu0 0.0
        %650 = vmatpush1.msra.mxu0 %v616
        %651 = vmatprep.subr.mxu0 0.0
        %652 = vmatpush1.msra.mxu0 %v615
        %653 = vmatprep.subr.mxu0 0.0
        %654 = vmatpush1.msra.mxu0 %v614
        %655 = vmatprep.subr.mxu0 0.0
        %656 = vmatpush1.msra.mxu0 %v613
        %657 = vmatprep.subr.mxu0 0.0
        %658 = vmatpush1.msra.mxu0 %v612
        %659 = vmatprep.subr.mxu0 0.0
        %660 = vmatpush1.msra.mxu0 %v611
        %661 = vmatprep.subr.mxu0 0.0
        %662 = vmatpush1.msra.mxu0 %v610
        %663 = vmatprep.subr.mxu0 0.0
        %664 = vmatpush2.msra.mxu0 0.0
        %665 = vmatprep.subr.mxu0 0.0
        %666 = vmatpush2.msra.mxu0 0.0
        %667 = vmatprep.subr.mxu0 0.0
        %668 = vmatpush2.msra.mxu0 0.0
        %669 = vmatprep.subr.mxu0 0.0
        %670 = vmatpush2.msra.mxu0 0.0
        %671 = vmatprep.subr.mxu0 0.0
        %672 = vmatpush2.msra.mxu0 0.0
        %673 = vmatprep.subr.mxu0 0.0
        %674 = vmatpush2.msra.mxu0 0.0
        %675 = vmatprep.subr.mxu0 0.0
        %676 = vmatpush2.msra.mxu0 0.0
        %677 = vmatprep.subr.mxu0 0.0
        %678 = vmatpush2.msra.mxu0 0.0
        %679 = vmatprep.subr.mxu0 0.0
        %680 = vmatpush2.msra.mxu0 0.0
        %681 = vmatprep.subr.mxu0 0.0
        %682 = vmatpush2.msra.mxu0 0.0
        %683 = vmatprep.subr.mxu0 0.0
        %684 = vmatpush2.msra.mxu0 0.0
        %685 = vmatprep.subr.mxu0 0.0
        %686 = vmatpush2.msra.mxu0 0.0
        %687 = vmatprep.subr.mxu0 0.0
        %688 = vmatpush2.msra.mxu0 0.0
        %689 = vmatprep.subr.mxu0 0.0
        %690 = vmatpush2.msra.mxu0 0.0
        %691 = vmatprep.subr.mxu0 0.0
        %692 = vmatpush2.msra.mxu0 0.0
        %693 = vmatprep.subr.mxu0 0.0
        %694 = vmatpush2.msra.mxu0 0.0
        %695 = vmatprep.mubr.f32.mxu0 0.0
        %696 = vmatmul.mubr.f32.gmra.mxu0 %v605
        %v697 = vpop.f32.mrf.mxu0
        %v698 = vadd.f32 %v630, %v697
        %v699 = vpop.f32.mrf.mxu0
        %700 = vmatprep.mubr.f32.mxu0 0.0
        %701 = vmatmul.mubr.f32.gmra.mxu0 %v606
        %v702 = vpop.f32.mrf.mxu0
        %v703 = vadd.f32 %v630, %v702
        %v704 = vpop.f32.mrf.mxu0
        %705 = vmatprep.mubr.f32.mxu0 0.0
        %706 = vmatmul.mubr.f32.gmra.mxu0 %v607
        %v707 = vpop.f32.mrf.mxu0
        %v708 = vadd.f32 %v630, %v707
        %v709 = vpop.f32.mrf.mxu0
        %710 = vmatprep.mubr.f32.mxu0 0.0
        %711 = vmatmul.mubr.f32.gmra.mxu0 %v608
        %v712 = vpop.f32.mrf.mxu0
        %v713 = vadd.f32 %v630, %v712
        %v714 = vpop.f32.mrf.mxu0
        %715 = vdwg.mxu0
        %vm716 = vcmp.gt.f32.partialorder %v698, 0.0
        %vm717 = vcmp.gt.f32.partialorder %v703, 0.0
        %vm718 = vcmp.gt.f32.partialorder %v708, 0.0
        %vm719 = vcmp.gt.f32.partialorder %v713, 0.0
        %v720 = vmin.f32 %v698, 0.0
        %v721 = vmin.f32 %v703, 0.0
        %v722 = vmin.f32 %v708, 0.0
        %v723 = vmin.f32 %v713, 0.0
        %v724 = vmul.f32 %v720, 1.442695
        %v725 = vpow.pop %v724
        %v726 = vmul.f32 %v721, 1.442695
        %v727 = vpow.pop %v726
        %v728 = vmul.f32 %v722, 1.442695
        %v729 = vpow.pop %v728
        %v730 = vmul.f32 %v723, 1.442695
        %v731 = vpow.pop %v730
        %v732 = vsub.f32 %v725, 1.0
        %v733 = vsub.f32 %v727, 1.0
        %v734 = vsub.f32 %v729, 1.0
        %v735 = vsub.f32 %v731, 1.0
        %v736 = vsel %vm716, %v698, %v732
        %v737 = vsel %vm717, %v703, %v733
        %v738 = vsel %vm718, %v708, %v734
        %v739 = vsel %vm719, %v713, %v735
        %v740 = vlaneseq
        %v741 = vand.u32 %v740, 127
        %v742 = vld [vmem:[%s467] sm:$0xff]
        %v743 = vld [vmem:[%s467 + $0x8] sm:$0xff]
        %v744 = vld [vmem:[%s467 + $0x10] sm:$0xff]
        %v745 = vld [vmem:[%s467 + $0x18] sm:$0xff]
        %746 = vset.pattern.permute.xlu0 0
        %747 = vperm.xlu0 %746, %v742
        %v748 = vpop.permute.xlu0 %747
        %749 = vset.pattern.permute.xlu0 0
        %750 = vperm.xlu0 %749, %v743
        %v751 = vpop.permute.xlu0 %750
        %752 = vset.pattern.permute.xlu0 0
        %753 = vperm.xlu0 %752, %v744
        %v754 = vpop.permute.xlu0 %753
        %755 = vset.pattern.permute.xlu0 0
        %756 = vperm.xlu0 %755, %v745
        %v757 = vpop.permute.xlu0 %756
        %vm758 = vcmp.eq.s32.totalorder %v741, %v748
        %vm759 = vcmp.eq.s32.totalorder %v741, %v751
        %vm760 = vcmp.eq.s32.totalorder %v741, %v754
        %vm761 = vcmp.eq.s32.totalorder %v741, %v757
        %v762 = vsel %vm758, 1, 0
        %v763 = vsel %vm759, 1, 0
        %v764 = vsel %vm760, 1, 0
        %v765 = vsel %vm761, 1, 0
        %v766 = vcvt.s32.f32 %v762
        %v767 = vcvt.s32.f32 %v763
        %v768 = vcvt.s32.f32 %v764
        %v769 = vcvt.s32.f32 %v765
        %v770 = vld [vmem:[%s473] sm:$0xff]
        %v771 = vld [vmem:[%s473 + $0x8] sm:$0xff]
        %v772 = vld [vmem:[%s473 + $0x10] sm:$0xff]
        %v773 = vld [vmem:[%s473 + $0x18] sm:$0xff]
        %774 = vset.pattern.permute.xlu0 0
        %775 = vperm.xlu0 %774, %v770
        %v776 = vpop.permute.xlu0 %775
        %777 = vset.pattern.permute.xlu0 0
        %778 = vperm.xlu0 %777, %v771
        %v779 = vpop.permute.xlu0 %778
        %780 = vset.pattern.permute.xlu0 0
        %781 = vperm.xlu0 %780, %v772
        %v782 = vpop.permute.xlu0 %781
        %783 = vset.pattern.permute.xlu0 0
        %784 = vperm.xlu0 %783, %v773
        %v785 = vpop.permute.xlu0 %784
        %vm786 = vcmp.eq.s32.totalorder %v741, %v776
        %vm787 = vcmp.eq.s32.totalorder %v741, %v779
        %vm788 = vcmp.eq.s32.totalorder %v741, %v782
        %vm789 = vcmp.eq.s32.totalorder %v741, %v785
        %v790 = vsel %vm786, 1, 0
        %v791 = vsel %vm787, 1, 0
        %v792 = vsel %vm788, 1, 0
        %v793 = vsel %vm789, 1, 0
        %v794 = vcvt.s32.f32 %v790
        %v795 = vcvt.s32.f32 %v791
        %v796 = vcvt.s32.f32 %v792
        %v797 = vcvt.s32.f32 %v793
        %v798 = vld [vmem:[#allocation2] sm:$0xff]
        %v799 = vld [vmem:[#allocation2 + $0x8] sm:$0xff]
        %vm800 = vcmask 130048
        %v802 = vsel %vm800, %v766, 0
        %v805 = vsel %vm800, %v767, 0
        %v808 = vsel %vm800, %v768, 0
        %v811 = vsel %vm800, %v769, 0
        %813 = vmatprep.subr.mxu0 0.0
        %814 = vmatpush1.msra.mxu0 0.0
        %815 = vmatprep.subr.mxu0 0.0
        %816 = vmatpush1.msra.mxu0 0.0
        %817 = vmatprep.subr.mxu0 0.0
        %818 = vmatpush1.msra.mxu0 0.0
        %819 = vmatprep.subr.mxu0 0.0
        %820 = vmatpush1.msra.mxu0 0.0
        %821 = vmatprep.subr.mxu0 0.0
        %822 = vmatpush1.msra.mxu0 0.0
        %823 = vmatprep.subr.mxu0 0.0
        %824 = vmatpush1.msra.mxu0 0.0
        %825 = vmatprep.subr.mxu0 0.0
        %826 = vmatpush1.msra.mxu0 0.0
        %827 = vmatprep.subr.mxu0 0.0
        %828 = vmatpush1.msra.mxu0 0.0
        %829 = vmatprep.subr.mxu0 0.0
        %830 = vmatpush1.msra.mxu0 0.0
        %831 = vmatprep.subr.mxu0 0.0
        %832 = vmatpush1.msra.mxu0 0.0
        %833 = vmatprep.subr.mxu0 0.0
        %834 = vmatpush1.msra.mxu0 0.0
        %835 = vmatprep.subr.mxu0 0.0
        %836 = vmatpush1.msra.mxu0 0.0
        %837 = vmatprep.subr.mxu0 0.0
        %838 = vmatpush1.msra.mxu0 0.0
        %839 = vmatprep.subr.mxu0 0.0
        %840 = vmatpush1.msra.mxu0 0.0
        %841 = vmatprep.subr.mxu0 0.0
        %842 = vmatpush1.msra.mxu0 %v799
        %843 = vmatprep.subr.mxu0 0.0
        %844 = vmatpush1.msra.mxu0 %v798
        %845 = vmatprep.subr.mxu0 0.0
        %846 = vmatpush2.msra.mxu0 0.0
        %847 = vmatprep.subr.mxu0 0.0
        %848 = vmatpush2.msra.mxu0 0.0
        %849 = vmatprep.subr.mxu0 0.0
        %850 = vmatpush2.msra.mxu0 0.0
        %851 = vmatprep.subr.mxu0 0.0
        %852 = vmatpush2.msra.mxu0 0.0
        %853 = vmatprep.subr.mxu0 0.0
        %854 = vmatpush2.msra.mxu0 0.0
        %855 = vmatprep.subr.mxu0 0.0
        %856 = vmatpush2.msra.mxu0 0.0
        %857 = vmatprep.subr.mxu0 0.0
        %858 = vmatpush2.msra.mxu0 0.0
        %859 = vmatprep.subr.mxu0 0.0
        %860 = vmatpush2.msra.mxu0 0.0
        %861 = vmatprep.subr.mxu0 0.0
        %862 = vmatpush2.msra.mxu0 0.0
        %863 = vmatprep.subr.mxu0 0.0
        %864 = vmatpush2.msra.mxu0 0.0
        %865 = vmatprep.subr.mxu0 0.0
        %866 = vmatpush2.msra.mxu0 0.0
        %867 = vmatprep.subr.mxu0 0.0
        %868 = vmatpush2.msra.mxu0 0.0
        %869 = vmatprep.subr.mxu0 0.0
        %870 = vmatpush2.msra.mxu0 0.0
        %871 = vmatprep.subr.mxu0 0.0
        %872 = vmatpush2.msra.mxu0 0.0
        %873 = vmatprep.subr.mxu0 0.0
        %874 = vmatpush2.msra.mxu0 0.0
        %875 = vmatprep.subr.mxu0 0.0
        %876 = vmatpush2.msra.mxu0 0.0
        %877 = vmatprep.mubr.f32.mxu0 0.0
        %878 = vmatmul.mubr.f32.gmra.mxu0 %v802
        %v879 = vpop.f32.mrf.mxu0
        %v880 = vadd.f32 0.0, %v879
        %v881 = vpop.f32.mrf.mxu0
        %882 = vmatprep.mubr.f32.mxu0 0.0
        %883 = vmatmul.mubr.f32.gmra.mxu0 %v805
        %v884 = vpop.f32.mrf.mxu0
        %v885 = vadd.f32 0.0, %v884
        %v886 = vpop.f32.mrf.mxu0
        %887 = vmatprep.mubr.f32.mxu0 0.0
        %888 = vmatmul.mubr.f32.gmra.mxu0 %v808
        %v889 = vpop.f32.mrf.mxu0
        %v890 = vadd.f32 0.0, %v889
        %v891 = vpop.f32.mrf.mxu0
        %892 = vmatprep.mubr.f32.mxu0 0.0
        %893 = vmatmul.mubr.f32.gmra.mxu0 %v811
        %v894 = vpop.f32.mrf.mxu0
        %v895 = vadd.f32 0.0, %v894
        %v896 = vpop.f32.mrf.mxu0
        %897 = vdwg.mxu0
        %v899 = vsel %vm800, %v794, 0
        %v902 = vsel %vm800, %v795, 0
        %v905 = vsel %vm800, %v796, 0
        %v908 = vsel %vm800, %v797, 0
        %910 = vmatprep.subr.mxu0 0.0
        %911 = vmatpush1.msra.mxu0 0.0
        %912 = vmatprep.subr.mxu0 0.0
        %913 = vmatpush1.msra.mxu0 0.0
        %914 = vmatprep.subr.mxu0 0.0
        %915 = vmatpush1.msra.mxu0 0.0
        %916 = vmatprep.subr.mxu0 0.0
        %917 = vmatpush1.msra.mxu0 0.0
        %918 = vmatprep.subr.mxu0 0.0
        %919 = vmatpush1.msra.mxu0 0.0
        %920 = vmatprep.subr.mxu0 0.0
        %921 = vmatpush1.msra.mxu0 0.0
        %922 = vmatprep.subr.mxu0 0.0
        %923 = vmatpush1.msra.mxu0 0.0
        %924 = vmatprep.subr.mxu0 0.0
        %925 = vmatpush1.msra.mxu0 0.0
        %926 = vmatprep.subr.mxu0 0.0
        %927 = vmatpush1.msra.mxu0 0.0
        %928 = vmatprep.subr.mxu0 0.0
        %929 = vmatpush1.msra.mxu0 0.0
        %930 = vmatprep.subr.mxu0 0.0
        %931 = vmatpush1.msra.mxu0 0.0
        %932 = vmatprep.subr.mxu0 0.0
        %933 = vmatpush1.msra.mxu0 0.0
        %934 = vmatprep.subr.mxu0 0.0
        %935 = vmatpush1.msra.mxu0 0.0
        %936 = vmatprep.subr.mxu0 0.0
        %937 = vmatpush1.msra.mxu0 0.0
        %938 = vmatprep.subr.mxu0 0.0
        %939 = vmatpush1.msra.mxu0 %v799
        %940 = vmatprep.subr.mxu0 0.0
        %941 = vmatpush1.msra.mxu0 %v798
        %942 = vmatprep.subr.mxu0 0.0
        %943 = vmatpush2.msra.mxu0 0.0
        %944 = vmatprep.subr.mxu0 0.0
        %945 = vmatpush2.msra.mxu0 0.0
        %946 = vmatprep.subr.mxu0 0.0
        %947 = vmatpush2.msra.mxu0 0.0
        %948 = vmatprep.subr.mxu0 0.0
        %949 = vmatpush2.msra.mxu0 0.0
        %950 = vmatprep.subr.mxu0 0.0
        %951 = vmatpush2.msra.mxu0 0.0
        %952 = vmatprep.subr.mxu0 0.0
        %953 = vmatpush2.msra.mxu0 0.0
        %954 = vmatprep.subr.mxu0 0.0
        %955 = vmatpush2.msra.mxu0 0.0
        %956 = vmatprep.subr.mxu0 0.0
        %957 = vmatpush2.msra.mxu0 0.0
        %958 = vmatprep.subr.mxu0 0.0
        %959 = vmatpush2.msra.mxu0 0.0
        %960 = vmatprep.subr.mxu0 0.0
        %961 = vmatpush2.msra.mxu0 0.0
        %962 = vmatprep.subr.mxu0 0.0
        %963 = vmatpush2.msra.mxu0 0.0
        %964 = vmatprep.subr.mxu0 0.0
        %965 = vmatpush2.msra.mxu0 0.0
        %966 = vmatprep.subr.mxu0 0.0
        %967 = vmatpush2.msra.mxu0 0.0
        %968 = vmatprep.subr.mxu0 0.0
        %969 = vmatpush2.msra.mxu0 0.0
        %970 = vmatprep.subr.mxu0 0.0
        %971 = vmatpush2.msra.mxu0 0.0
        %972 = vmatprep.subr.mxu0 0.0
        %973 = vmatpush2.msra.mxu0 0.0
        %974 = vmatprep.mubr.f32.mxu0 0.0
        %975 = vmatmul.mubr.f32.gmra.mxu0 %v899
        %v976 = vpop.f32.mrf.mxu0
        %v977 = vadd.f32 0.0, %v976
        %v978 = vpop.f32.mrf.mxu0
        %979 = vmatprep.mubr.f32.mxu0 0.0
        %980 = vmatmul.mubr.f32.gmra.mxu0 %v902
        %v981 = vpop.f32.mrf.mxu0
        %v982 = vadd.f32 0.0, %v981
        %v983 = vpop.f32.mrf.mxu0
        %984 = vmatprep.mubr.f32.mxu0 0.0
        %985 = vmatmul.mubr.f32.gmra.mxu0 %v905
        %v986 = vpop.f32.mrf.mxu0
        %v987 = vadd.f32 0.0, %v986
        %v988 = vpop.f32.mrf.mxu0
        %989 = vmatprep.mubr.f32.mxu0 0.0
        %990 = vmatmul.mubr.f32.gmra.mxu0 %v908
        %v991 = vpop.f32.mrf.mxu0
        %v992 = vadd.f32 0.0, %v991
        %v993 = vpop.f32.mrf.mxu0
        %994 = vdwg.mxu0
        %v995 = vld [vmem:[%s6] sm:$0xff]
        %v996 = vld [vmem:[%s6 + $0x8] sm:$0xff]
        %v997 = vld [vmem:[%s6 + $0x10] sm:$0xff]
        %v998 = vld [vmem:[%s6 + $0x18] sm:$0xff]
        %v999 = vld [vmem:[%s6 + $0x20] sm:$0xff]
        %v1000 = vld [vmem:[%s6 + $0x28] sm:$0xff]
        %v1001 = vld [vmem:[%s6 + $0x30] sm:$0xff]
        %v1002 = vld [vmem:[%s6 + $0x38] sm:$0xff]
        %v1003 = vld [vmem:[%s6 + $0x40] sm:$0xff]
        %v1004 = vld [vmem:[%s6 + $0x48] sm:$0xff]
        %v1005 = vld [vmem:[%s6 + $0x50] sm:$0xff]
        %v1006 = vld [vmem:[%s6 + $0x58] sm:$0xff]
        %v1007 = vld [vmem:[%s6 + $0x60] sm:$0xff]
        %v1008 = vld [vmem:[%s6 + $0x68] sm:$0xff]
        %v1009 = vld [vmem:[%s6 + $0x70] sm:$0xff]
        %v1010 = vld [vmem:[%s6 + $0x78] sm:$0xff]
        %v1011 = vld [vmem:[%s6 + $0x80] sm:$0xff]
        %v1012 = vld [vmem:[%s6 + $0x88] sm:$0xff]
        %v1013 = vld [vmem:[%s6 + $0x90] sm:$0xff]
        %v1014 = vld [vmem:[%s6 + $0x98] sm:$0xff]
        %v1015 = vld [vmem:[%s6 + $0xa0] sm:$0xff]
        %v1016 = vld [vmem:[%s6 + $0xa8] sm:$0xff]
        %v1017 = vld [vmem:[%s6 + $0xb0] sm:$0xff]
        %v1018 = vld [vmem:[%s6 + $0xb8] sm:$0xff]
        %v1019 = vld [vmem:[%s6 + $0xc0] sm:$0xff]
        %v1020 = vld [vmem:[%s6 + $0xc8] sm:$0xff]
        %v1021 = vld [vmem:[%s6 + $0xd0] sm:$0xff]
        %v1022 = vld [vmem:[%s6 + $0xd8] sm:$0xff]
        %v1023 = vld [vmem:[%s6 + $0xe0] sm:$0xff]
        %v1024 = vld [vmem:[%s6 + $0xe8] sm:$0xff]
        %v1025 = vld [vmem:[%s6 + $0xf0] sm:$0xff]
        %v1026 = vld [vmem:[%s6 + $0xf8] sm:$0xff]
        %v1027 = vld [vmem:[%s6 + $0x100] sm:$0xff]
        %v1028 = vld [vmem:[%s6 + $0x108] sm:$0xff]
        %v1029 = vld [vmem:[%s6 + $0x110] sm:$0xff]
        %v1030 = vld [vmem:[%s6 + $0x118] sm:$0xff]
        %v1031 = vld [vmem:[%s6 + $0x120] sm:$0xff]
        %v1032 = vld [vmem:[%s6 + $0x128] sm:$0xff]
        %v1033 = vld [vmem:[%s6 + $0x130] sm:$0xff]
        %v1034 = vld [vmem:[%s6 + $0x138] sm:$0xff]
        %v1035 = vld [vmem:[%s6 + $0x140] sm:$0xff]
        %v1036 = vld [vmem:[%s6 + $0x148] sm:$0xff]
        %v1037 = vld [vmem:[%s6 + $0x150] sm:$0xff]
        %v1038 = vld [vmem:[%s6 + $0x158] sm:$0xff]
        %v1039 = vld [vmem:[%s6 + $0x160] sm:$0xff]
        %v1040 = vld [vmem:[%s6 + $0x168] sm:$0xff]
        %v1041 = vld [vmem:[%s6 + $0x170] sm:$0xff]
        %v1042 = vld [vmem:[%s6 + $0x178] sm:$0xff]
        %v1043 = vld [vmem:[%s10 + $0x2] sm:$0x1]
        %v1044 = vlaneseq
        %v1045 = vshrl.u32 %v1044, 7
        %v1046 = vsub.s32 0, %v1045
        %v1047 = vrot.slane %v1043, %v1046
        %1048 = vmatprep.subr.mxu0 0.0
        %1049 = vmatpush1.msra.mxu0 %v1010
        %1050 = vmatprep.subr.mxu0 0.0
        %1051 = vmatpush1.msra.mxu0 %v1009
        %1052 = vmatprep.subr.mxu0 0.0
        %1053 = vmatpush1.msra.mxu0 %v1008
        %1054 = vmatprep.subr.mxu0 0.0
        %1055 = vmatpush1.msra.mxu0 %v1007
        %1056 = vmatprep.subr.mxu0 0.0
        %1057 = vmatpush1.msra.mxu0 %v1006
        %1058 = vmatprep.subr.mxu0 0.0
        %1059 = vmatpush1.msra.mxu0 %v1005
        %1060 = vmatprep.subr.mxu0 0.0
        %1061 = vmatpush1.msra.mxu0 %v1004
        %1062 = vmatprep.subr.mxu0 0.0
        %1063 = vmatpush1.msra.mxu0 %v1003
        %1064 = vmatprep.subr.mxu0 0.0
        %1065 = vmatpush1.msra.mxu0 %v1002
        %1066 = vmatprep.subr.mxu0 0.0
        %1067 = vmatpush1.msra.mxu0 %v1001
        %1068 = vmatprep.subr.mxu0 0.0
        %1069 = vmatpush1.msra.mxu0 %v1000
        %1070 = vmatprep.subr.mxu0 0.0
        %1071 = vmatpush1.msra.mxu0 %v999
        %1072 = vmatprep.subr.mxu0 0.0
        %1073 = vmatpush1.msra.mxu0 %v998
        %1074 = vmatprep.subr.mxu0 0.0
        %1075 = vmatpush1.msra.mxu0 %v997
        %1076 = vmatprep.subr.mxu0 0.0
        %1077 = vmatpush1.msra.mxu0 %v996
        %1078 = vmatprep.subr.mxu0 0.0
        %1079 = vmatpush1.msra.mxu0 %v995
        %1080 = vmatprep.subr.mxu0 0.0
        %1081 = vmatpush2.msra.mxu0 %v1026
        %1082 = vmatprep.subr.mxu0 0.0
        %1083 = vmatpush2.msra.mxu0 %v1025
        %1084 = vmatprep.subr.mxu0 0.0
        %1085 = vmatpush2.msra.mxu0 %v1024
        %1086 = vmatprep.subr.mxu0 0.0
        %1087 = vmatpush2.msra.mxu0 %v1023
        %1088 = vmatprep.subr.mxu0 0.0
        %1089 = vmatpush2.msra.mxu0 %v1022
        %1090 = vmatprep.subr.mxu0 0.0
        %1091 = vmatpush2.msra.mxu0 %v1021
        %1092 = vmatprep.subr.mxu0 0.0
        %1093 = vmatpush2.msra.mxu0 %v1020
        %1094 = vmatprep.subr.mxu0 0.0
        %1095 = vmatpush2.msra.mxu0 %v1019
        %1096 = vmatprep.subr.mxu0 0.0
        %1097 = vmatpush2.msra.mxu0 %v1018
        %1098 = vmatprep.subr.mxu0 0.0
        %1099 = vmatpush2.msra.mxu0 %v1017
        %1100 = vmatprep.subr.mxu0 0.0
        %1101 = vmatpush2.msra.mxu0 %v1016
        %1102 = vmatprep.subr.mxu0 0.0
        %1103 = vmatpush2.msra.mxu0 %v1015
        %1104 = vmatprep.subr.mxu0 0.0
        %1105 = vmatpush2.msra.mxu0 %v1014
        %1106 = vmatprep.subr.mxu0 0.0
        %1107 = vmatpush2.msra.mxu0 %v1013
        %1108 = vmatprep.subr.mxu0 0.0
        %1109 = vmatpush2.msra.mxu0 %v1012
        %1110 = vmatprep.subr.mxu0 0.0
        %1111 = vmatpush2.msra.mxu0 %v1011
        %1112 = vmatprep.mubr.f32.mxu0 %v977
        %1113 = vmatmul.mubr.f32.gmra.mxu0 %v880
        %v1114 = vpop.f32.mrf.mxu0
        %v1115 = vadd.f32 %v1047, %v1114
        %v1116 = vpop.f32.mrf.mxu0
        %1117 = vmatprep.mubr.f32.mxu0 %v982
        %1118 = vmatmul.mubr.f32.gmra.mxu0 %v885
        %v1119 = vpop.f32.mrf.mxu0
        %v1120 = vadd.f32 %v1047, %v1119
        %v1121 = vpop.f32.mrf.mxu0
        %1122 = vmatprep.mubr.f32.mxu0 %v987
        %1123 = vmatmul.mubr.f32.gmra.mxu0 %v890
        %v1124 = vpop.f32.mrf.mxu0
        %v1125 = vadd.f32 %v1047, %v1124
        %v1126 = vpop.f32.mrf.mxu0
        %1127 = vmatprep.mubr.f32.mxu0 %v992
        %1128 = vmatmul.mubr.f32.gmra.mxu0 %v895
        %v1129 = vpop.f32.mrf.mxu0
        %v1130 = vadd.f32 %v1047, %v1129
        %v1131 = vpop.f32.mrf.mxu0
        %1132 = vdwg.mxu0
        %1133 = vmatprep.subr.mxu0 0.0
        %1134 = vmatpush1.msra.mxu0 %v1042
        %1135 = vmatprep.subr.mxu0 0.0
        %1136 = vmatpush1.msra.mxu0 %v1041
        %1137 = vmatprep.subr.mxu0 0.0
        %1138 = vmatpush1.msra.mxu0 %v1040
        %1139 = vmatprep.subr.mxu0 0.0
        %1140 = vmatpush1.msra.mxu0 %v1039
        %1141 = vmatprep.subr.mxu0 0.0
        %1142 = vmatpush1.msra.mxu0 %v1038
        %1143 = vmatprep.subr.mxu0 0.0
        %1144 = vmatpush1.msra.mxu0 %v1037
        %1145 = vmatprep.subr.mxu0 0.0
        %1146 = vmatpush1.msra.mxu0 %v1036
        %1147 = vmatprep.subr.mxu0 0.0
        %1148 = vmatpush1.msra.mxu0 %v1035
        %1149 = vmatprep.subr.mxu0 0.0
        %1150 = vmatpush1.msra.mxu0 %v1034
        %1151 = vmatprep.subr.mxu0 0.0
        %1152 = vmatpush1.msra.mxu0 %v1033
        %1153 = vmatprep.subr.mxu0 0.0
        %1154 = vmatpush1.msra.mxu0 %v1032
        %1155 = vmatprep.subr.mxu0 0.0
        %1156 = vmatpush1.msra.mxu0 %v1031
        %1157 = vmatprep.subr.mxu0 0.0
        %1158 = vmatpush1.msra.mxu0 %v1030
        %1159 = vmatprep.subr.mxu0 0.0
        %1160 = vmatpush1.msra.mxu0 %v1029
        %1161 = vmatprep.subr.mxu0 0.0
        %1162 = vmatpush1.msra.mxu0 %v1028
        %1163 = vmatprep.subr.mxu0 0.0
        %1164 = vmatpush1.msra.mxu0 %v1027
        %1165 = vmatprep.subr.mxu0 0.0
        %1166 = vmatpush2.msra.mxu0 0.0
        %1167 = vmatprep.subr.mxu0 0.0
        %1168 = vmatpush2.msra.mxu0 0.0
        %1169 = vmatprep.subr.mxu0 0.0
        %1170 = vmatpush2.msra.mxu0 0.0
        %1171 = vmatprep.subr.mxu0 0.0
        %1172 = vmatpush2.msra.mxu0 0.0
        %1173 = vmatprep.subr.mxu0 0.0
        %1174 = vmatpush2.msra.mxu0 0.0
        %1175 = vmatprep.subr.mxu0 0.0
        %1176 = vmatpush2.msra.mxu0 0.0
        %1177 = vmatprep.subr.mxu0 0.0
        %1178 = vmatpush2.msra.mxu0 0.0
        %1179 = vmatprep.subr.mxu0 0.0
        %1180 = vmatpush2.msra.mxu0 0.0
        %1181 = vmatprep.subr.mxu0 0.0
        %1182 = vmatpush2.msra.mxu0 0.0
        %1183 = vmatprep.subr.mxu0 0.0
        %1184 = vmatpush2.msra.mxu0 0.0
        %1185 = vmatprep.subr.mxu0 0.0
        %1186 = vmatpush2.msra.mxu0 0.0
        %1187 = vmatprep.subr.mxu0 0.0
        %1188 = vmatpush2.msra.mxu0 0.0
        %1189 = vmatprep.subr.mxu0 0.0
        %1190 = vmatpush2.msra.mxu0 0.0
        %1191 = vmatprep.subr.mxu0 0.0
        %1192 = vmatpush2.msra.mxu0 0.0
        %1193 = vmatprep.subr.mxu0 0.0
        %1194 = vmatpush2.msra.mxu0 0.0
        %1195 = vmatprep.subr.mxu0 0.0
        %1196 = vmatpush2.msra.mxu0 0.0
        %1197 = vmatprep.mubr.f32.mxu0 0.0
        %1198 = vmatmul.mubr.f32.gmra.mxu0 %v736
        %v1199 = vpop.f32.mrf.mxu0
        %v1200 = vadd.f32 %v1115, %v1199
        %v1201 = vpop.f32.mrf.mxu0
        %1202 = vmatprep.mubr.f32.mxu0 0.0
        %1203 = vmatmul.mubr.f32.gmra.mxu0 %v737
        %v1204 = vpop.f32.mrf.mxu0
        %v1205 = vadd.f32 %v1120, %v1204
        %v1206 = vpop.f32.mrf.mxu0
        %1207 = vmatprep.mubr.f32.mxu0 0.0
        %1208 = vmatmul.mubr.f32.gmra.mxu0 %v738
        %v1209 = vpop.f32.mrf.mxu0
        %v1210 = vadd.f32 %v1125, %v1209
        %v1211 = vpop.f32.mrf.mxu0
        %1212 = vmatprep.mubr.f32.mxu0 0.0
        %1213 = vmatmul.mubr.f32.gmra.mxu0 %v739
        %v1214 = vpop.f32.mrf.mxu0
        %v1215 = vadd.f32 %v1130, %v1214
        %v1216 = vpop.f32.mrf.mxu0
        %1217 = vdwg.mxu0
        %vm1218 = vcmp.gt.f32.partialorder %v1200, 0.0
        %vm1219 = vcmp.gt.f32.partialorder %v1205, 0.0
        %vm1220 = vcmp.gt.f32.partialorder %v1210, 0.0
        %vm1221 = vcmp.gt.f32.partialorder %v1215, 0.0
        %v1222 = vmin.f32 %v1200, 0.0
        %v1223 = vmin.f32 %v1205, 0.0
        %v1224 = vmin.f32 %v1210, 0.0
        %v1225 = vmin.f32 %v1215, 0.0
        %v1226 = vmul.f32 %v1222, 1.442695
        %v1227 = vpow.pop %v1226
        %v1228 = vmul.f32 %v1223, 1.442695
        %v1229 = vpow.pop %v1228
        %v1230 = vmul.f32 %v1224, 1.442695
        %v1231 = vpow.pop %v1230
        %v1232 = vmul.f32 %v1225, 1.442695
        %v1233 = vpow.pop %v1232
        %v1234 = vsub.f32 %v1227, 1.0
        %v1235 = vsub.f32 %v1229, 1.0
        %v1236 = vsub.f32 %v1231, 1.0
        %v1237 = vsub.f32 %v1233, 1.0
        %v1238 = vsel %vm1218, %v1200, %v1234
        %v1239 = vsel %vm1219, %v1205, %v1235
        %v1240 = vsel %vm1220, %v1210, %v1236
        %v1241 = vsel %vm1221, %v1215, %v1237
        %s1242 = scalar_lea.vmem %s9, 128
        %v1243 = vld [vmem:[%s1242] sm:$0xff]
        %v1244 = vld [vmem:[%s1242 + $0x8] sm:$0xff]
        %v1245 = vld [vmem:[%s1242 + $0x10] sm:$0xff]
        %v1246 = vld [vmem:[%s1242 + $0x18] sm:$0xff]
        %v1247 = vld [vmem:[%s1242 + $0x20] sm:$0xff]
        %v1248 = vld [vmem:[%s1242 + $0x28] sm:$0xff]
        %v1249 = vld [vmem:[%s1242 + $0x30] sm:$0xff]
        %v1250 = vld [vmem:[%s1242 + $0x38] sm:$0xff]
        %v1251 = vld [vmem:[%s1242 + $0x40] sm:$0xff]
        %v1252 = vld [vmem:[%s1242 + $0x48] sm:$0xff]
        %v1253 = vld [vmem:[%s1242 + $0x50] sm:$0xff]
        %v1254 = vld [vmem:[%s1242 + $0x58] sm:$0xff]
        %v1255 = vld [vmem:[%s1242 + $0x60] sm:$0xff]
        %v1256 = vld [vmem:[%s1242 + $0x68] sm:$0xff]
        %v1257 = vld [vmem:[%s1242 + $0x70] sm:$0xff]
        %v1258 = vld [vmem:[%s1242 + $0x78] sm:$0xff]
        %v1259 = vld [vmem:[%s11 + $0x1] sm:$0x1]
        %v1260 = vlaneseq
        %v1261 = vshrl.u32 %v1260, 7
        %v1262 = vsub.s32 0, %v1261
        %v1263 = vrot.slane %v1259, %v1262
        %1264 = vmatprep.subr.mxu0 0.0
        %1265 = vmatpush1.msra.mxu0 %v1258
        %1266 = vmatprep.subr.mxu0 0.0
        %1267 = vmatpush1.msra.mxu0 %v1257
        %1268 = vmatprep.subr.mxu0 0.0
        %1269 = vmatpush1.msra.mxu0 %v1256
        %1270 = vmatprep.subr.mxu0 0.0
        %1271 = vmatpush1.msra.mxu0 %v1255
        %1272 = vmatprep.subr.mxu0 0.0
        %1273 = vmatpush1.msra.mxu0 %v1254
        %1274 = vmatprep.subr.mxu0 0.0
        %1275 = vmatpush1.msra.mxu0 %v1253
        %1276 = vmatprep.subr.mxu0 0.0
        %1277 = vmatpush1.msra.mxu0 %v1252
        %1278 = vmatprep.subr.mxu0 0.0
        %1279 = vmatpush1.msra.mxu0 %v1251
        %1280 = vmatprep.subr.mxu0 0.0
        %1281 = vmatpush1.msra.mxu0 %v1250
        %1282 = vmatprep.subr.mxu0 0.0
        %1283 = vmatpush1.msra.mxu0 %v1249
        %1284 = vmatprep.subr.mxu0 0.0
        %1285 = vmatpush1.msra.mxu0 %v1248
        %1286 = vmatprep.subr.mxu0 0.0
        %1287 = vmatpush1.msra.mxu0 %v1247
        %1288 = vmatprep.subr.mxu0 0.0
        %1289 = vmatpush1.msra.mxu0 %v1246
        %1290 = vmatprep.subr.mxu0 0.0
        %1291 = vmatpush1.msra.mxu0 %v1245
        %1292 = vmatprep.subr.mxu0 0.0
        %1293 = vmatpush1.msra.mxu0 %v1244
        %1294 = vmatprep.subr.mxu0 0.0
        %1295 = vmatpush1.msra.mxu0 %v1243
        %1296 = vmatprep.subr.mxu0 0.0
        %1297 = vmatpush2.msra.mxu0 0.0
        %1298 = vmatprep.subr.mxu0 0.0
        %1299 = vmatpush2.msra.mxu0 0.0
        %1300 = vmatprep.subr.mxu0 0.0
        %1301 = vmatpush2.msra.mxu0 0.0
        %1302 = vmatprep.subr.mxu0 0.0
        %1303 = vmatpush2.msra.mxu0 0.0
        %1304 = vmatprep.subr.mxu0 0.0
        %1305 = vmatpush2.msra.mxu0 0.0
        %1306 = vmatprep.subr.mxu0 0.0
        %1307 = vmatpush2.msra.mxu0 0.0
        %1308 = vmatprep.subr.mxu0 0.0
        %1309 = vmatpush2.msra.mxu0 0.0
        %1310 = vmatprep.subr.mxu0 0.0
        %1311 = vmatpush2.msra.mxu0 0.0
        %1312 = vmatprep.subr.mxu0 0.0
        %1313 = vmatpush2.msra.mxu0 0.0
        %1314 = vmatprep.subr.mxu0 0.0
        %1315 = vmatpush2.msra.mxu0 0.0
        %1316 = vmatprep.subr.mxu0 0.0
        %1317 = vmatpush2.msra.mxu0 0.0
        %1318 = vmatprep.subr.mxu0 0.0
        %1319 = vmatpush2.msra.mxu0 0.0
        %1320 = vmatprep.subr.mxu0 0.0
        %1321 = vmatpush2.msra.mxu0 0.0
        %1322 = vmatprep.subr.mxu0 0.0
        %1323 = vmatpush2.msra.mxu0 0.0
        %1324 = vmatprep.subr.mxu0 0.0
        %1325 = vmatpush2.msra.mxu0 0.0
        %1326 = vmatprep.subr.mxu0 0.0
        %1327 = vmatpush2.msra.mxu0 0.0
        %1328 = vmatprep.mubr.f32.mxu0 0.0
        %1329 = vmatmul.mubr.f32.gmra.mxu0 %v1238
        %v1330 = vpop.f32.mrf.mxu0
        %v1331 = vadd.f32 %v1263, %v1330
        %v1332 = vpop.f32.mrf.mxu0
        %1333 = vmatprep.mubr.f32.mxu0 0.0
        %1334 = vmatmul.mubr.f32.gmra.mxu0 %v1239
        %v1335 = vpop.f32.mrf.mxu0
        %v1336 = vadd.f32 %v1263, %v1335
        %v1337 = vpop.f32.mrf.mxu0
        %1338 = vmatprep.mubr.f32.mxu0 0.0
        %1339 = vmatmul.mubr.f32.gmra.mxu0 %v1240
        %v1340 = vpop.f32.mrf.mxu0
        %v1341 = vadd.f32 %v1263, %v1340
        %v1342 = vpop.f32.mrf.mxu0
        %1343 = vmatprep.mubr.f32.mxu0 0.0
        %1344 = vmatmul.mubr.f32.gmra.mxu0 %v1241
        %v1345 = vpop.f32.mrf.mxu0
        %v1346 = vadd.f32 %v1263, %v1345
        %v1347 = vpop.f32.mrf.mxu0
        %1348 = vdwg.mxu0
        %v1349 = vadd.f32 %v1331, %v605
        %v1350 = vadd.f32 %v1336, %v606
        %v1351 = vadd.f32 %v1341, %v607
        %v1352 = vadd.f32 %v1346, %v608
        %vm1353 = vcmp.gt.f32.partialorder %v1349, 0.0
        %vm1354 = vcmp.gt.f32.partialorder %v1350, 0.0
        %vm1355 = vcmp.gt.f32.partialorder %v1351, 0.0
        %vm1356 = vcmp.gt.f32.partialorder %v1352, 0.0
        %v1357 = vmin.f32 %v1349, 0.0
        %v1358 = vmin.f32 %v1350, 0.0
        %v1359 = vmin.f32 %v1351, 0.0
        %v1360 = vmin.f32 %v1352, 0.0
        %v1361 = vmul.f32 %v1357, 1.442695
        %v1362 = vpow.pop %v1361
        %v1363 = vmul.f32 %v1358, 1.442695
        %v1364 = vpow.pop %v1363
        %v1365 = vmul.f32 %v1359, 1.442695
        %v1366 = vpow.pop %v1365
        %v1367 = vmul.f32 %v1360, 1.442695
        %v1368 = vpow.pop %v1367
        %v1369 = vsub.f32 %v1362, 1.0
        %v1370 = vsub.f32 %v1364, 1.0
        %v1371 = vsub.f32 %v1366, 1.0
        %v1372 = vsub.f32 %v1368, 1.0
        %v1373 = vsel %vm1353, %v1349, %v1369
        %v1374 = vsel %vm1354, %v1350, %v1370
        %v1375 = vsel %vm1355, %v1351, %v1371
        %v1376 = vsel %vm1356, %v1352, %v1372
        %1377 = vst [vmem:[%s485] sm:$0xff] %v1373
        %1378 = vst [vmem:[%s485 + $0x8] sm:$0xff] %v1374
        %1379 = vst [vmem:[%s485 + $0x10] sm:$0xff] %v1375
        %1380 = vst [vmem:[%s485 + $0x18] sm:$0xff] %v1376
        %v1381 = vld [vmem:[%s7] sm:$0xff]
        %v1382 = vld [vmem:[%s7 + $0x8] sm:$0xff]
        %v1383 = vld [vmem:[%s7 + $0x10] sm:$0xff]
        %v1384 = vld [vmem:[%s7 + $0x18] sm:$0xff]
        %v1385 = vld [vmem:[%s7 + $0x20] sm:$0xff]
        %v1386 = vld [vmem:[%s7 + $0x28] sm:$0xff]
        %v1387 = vld [vmem:[%s7 + $0x30] sm:$0xff]
        %v1388 = vld [vmem:[%s7 + $0x38] sm:$0xff]
        %v1389 = vld [vmem:[%s7 + $0x40] sm:$0xff]
        %v1390 = vld [vmem:[%s7 + $0x48] sm:$0xff]
        %v1391 = vld [vmem:[%s7 + $0x50] sm:$0xff]
        %v1392 = vld [vmem:[%s7 + $0x58] sm:$0xff]
        %v1393 = vld [vmem:[%s7 + $0x60] sm:$0xff]
        %v1394 = vld [vmem:[%s7 + $0x68] sm:$0xff]
        %v1395 = vld [vmem:[%s7 + $0x70] sm:$0xff]
        %v1396 = vld [vmem:[%s7 + $0x78] sm:$0xff]
        %v1397 = vld [vmem:[%s7 + $0x80] sm:$0xff]
        %v1398 = vld [vmem:[%s7 + $0x88] sm:$0xff]
        %v1399 = vld [vmem:[%s7 + $0x90] sm:$0xff]
        %v1400 = vld [vmem:[%s7 + $0x98] sm:$0xff]
        %v1401 = vld [vmem:[%s7 + $0xa0] sm:$0xff]
        %v1402 = vld [vmem:[%s7 + $0xa8] sm:$0xff]
        %v1403 = vld [vmem:[%s7 + $0xb0] sm:$0xff]
        %v1404 = vld [vmem:[%s7 + $0xb8] sm:$0xff]
        %v1405 = vld [vmem:[%s7 + $0xc0] sm:$0xff]
        %v1406 = vld [vmem:[%s7 + $0xc8] sm:$0xff]
        %v1407 = vld [vmem:[%s7 + $0xd0] sm:$0xff]
        %v1408 = vld [vmem:[%s7 + $0xd8] sm:$0xff]
        %v1409 = vld [vmem:[%s7 + $0xe0] sm:$0xff]
        %v1410 = vld [vmem:[%s7 + $0xe8] sm:$0xff]
        %v1411 = vld [vmem:[%s7 + $0xf0] sm:$0xff]
        %v1412 = vld [vmem:[%s7 + $0xf8] sm:$0xff]
        %v1413 = vld [vmem:[%s10 + $0x3] sm:$0x1]
        %v1414 = vlaneseq
        %v1415 = vshrl.u32 %v1414, 7
        %v1416 = vsub.s32 0, %v1415
        %v1417 = vrot.slane %v1413, %v1416
        %1418 = vmatprep.subr.mxu0 0.0
        %1419 = vmatpush1.msra.mxu0 %v1396
        %1420 = vmatprep.subr.mxu0 0.0
        %1421 = vmatpush1.msra.mxu0 %v1395
        %1422 = vmatprep.subr.mxu0 0.0
        %1423 = vmatpush1.msra.mxu0 %v1394
        %1424 = vmatprep.subr.mxu0 0.0
        %1425 = vmatpush1.msra.mxu0 %v1393
        %1426 = vmatprep.subr.mxu0 0.0
        %1427 = vmatpush1.msra.mxu0 %v1392
        %1428 = vmatprep.subr.mxu0 0.0
        %1429 = vmatpush1.msra.mxu0 %v1391
        %1430 = vmatprep.subr.mxu0 0.0
        %1431 = vmatpush1.msra.mxu0 %v1390
        %1432 = vmatprep.subr.mxu0 0.0
        %1433 = vmatpush1.msra.mxu0 %v1389
        %1434 = vmatprep.subr.mxu0 0.0
        %1435 = vmatpush1.msra.mxu0 %v1388
        %1436 = vmatprep.subr.mxu0 0.0
        %1437 = vmatpush1.msra.mxu0 %v1387
        %1438 = vmatprep.subr.mxu0 0.0
        %1439 = vmatpush1.msra.mxu0 %v1386
        %1440 = vmatprep.subr.mxu0 0.0
        %1441 = vmatpush1.msra.mxu0 %v1385
        %1442 = vmatprep.subr.mxu0 0.0
        %1443 = vmatpush1.msra.mxu0 %v1384
        %1444 = vmatprep.subr.mxu0 0.0
        %1445 = vmatpush1.msra.mxu0 %v1383
        %1446 = vmatprep.subr.mxu0 0.0
        %1447 = vmatpush1.msra.mxu0 %v1382
        %1448 = vmatprep.subr.mxu0 0.0
        %1449 = vmatpush1.msra.mxu0 %v1381
        %1450 = vmatprep.subr.mxu0 0.0
        %1451 = vmatpush2.msra.mxu0 %v1412
        %1452 = vmatprep.subr.mxu0 0.0
        %1453 = vmatpush2.msra.mxu0 %v1411
        %1454 = vmatprep.subr.mxu0 0.0
        %1455 = vmatpush2.msra.mxu0 %v1410
        %1456 = vmatprep.subr.mxu0 0.0
        %1457 = vmatpush2.msra.mxu0 %v1409
        %1458 = vmatprep.subr.mxu0 0.0
        %1459 = vmatpush2.msra.mxu0 %v1408
        %1460 = vmatprep.subr.mxu0 0.0
        %1461 = vmatpush2.msra.mxu0 %v1407
        %1462 = vmatprep.subr.mxu0 0.0
        %1463 = vmatpush2.msra.mxu0 %v1406
        %1464 = vmatprep.subr.mxu0 0.0
        %1465 = vmatpush2.msra.mxu0 %v1405
        %1466 = vmatprep.subr.mxu0 0.0
        %1467 = vmatpush2.msra.mxu0 %v1404
        %1468 = vmatprep.subr.mxu0 0.0
        %1469 = vmatpush2.msra.mxu0 %v1403
        %1470 = vmatprep.subr.mxu0 0.0
        %1471 = vmatpush2.msra.mxu0 %v1402
        %1472 = vmatprep.subr.mxu0 0.0
        %1473 = vmatpush2.msra.mxu0 %v1401
        %1474 = vmatprep.subr.mxu0 0.0
        %1475 = vmatpush2.msra.mxu0 %v1400
        %1476 = vmatprep.subr.mxu0 0.0
        %1477 = vmatpush2.msra.mxu0 %v1399
        %1478 = vmatprep.subr.mxu0 0.0
        %1479 = vmatpush2.msra.mxu0 %v1398
        %1480 = vmatprep.subr.mxu0 0.0
        %1481 = vmatpush2.msra.mxu0 %v1397
        %1482 = vmatprep.mubr.f32.mxu0 %v1238
        %1483 = vmatmul.mubr.f32.gmra.mxu0 %v880
        %v1484 = vpop.f32.mrf.mxu0
        %v1485 = vadd.f32 %v1417, %v1484
        %v1486 = vpop.f32.mrf.mxu0
        %1487 = vmatprep.mubr.f32.mxu0 %v1239
        %1488 = vmatmul.mubr.f32.gmra.mxu0 %v885
        %v1489 = vpop.f32.mrf.mxu0
        %v1490 = vadd.f32 %v1417, %v1489
        %v1491 = vpop.f32.mrf.mxu0
        %1492 = vmatprep.mubr.f32.mxu0 %v1240
        %1493 = vmatmul.mubr.f32.gmra.mxu0 %v890
        %v1494 = vpop.f32.mrf.mxu0
        %v1495 = vadd.f32 %v1417, %v1494
        %v1496 = vpop.f32.mrf.mxu0
        %1497 = vmatprep.mubr.f32.mxu0 %v1241
        %1498 = vmatmul.mubr.f32.gmra.mxu0 %v895
        %v1499 = vpop.f32.mrf.mxu0
        %v1500 = vadd.f32 %v1417, %v1499
        %v1501 = vpop.f32.mrf.mxu0
        %1502 = vdwg.mxu0
        %vm1503 = vcmp.gt.f32.partialorder %v1485, 0.0
        %vm1504 = vcmp.gt.f32.partialorder %v1490, 0.0
        %vm1505 = vcmp.gt.f32.partialorder %v1495, 0.0
        %vm1506 = vcmp.gt.f32.partialorder %v1500, 0.0
        %v1507 = vmin.f32 %v1485, 0.0
        %v1508 = vmin.f32 %v1490, 0.0
        %v1509 = vmin.f32 %v1495, 0.0
        %v1510 = vmin.f32 %v1500, 0.0
        %v1511 = vmul.f32 %v1507, 1.442695
        %v1512 = vpow.pop %v1511
        %v1513 = vmul.f32 %v1508, 1.442695
        %v1514 = vpow.pop %v1513
        %v1515 = vmul.f32 %v1509, 1.442695
        %v1516 = vpow.pop %v1515
        %v1517 = vmul.f32 %v1510, 1.442695
        %v1518 = vpow.pop %v1517
        %v1519 = vsub.f32 %v1512, 1.0
        %v1520 = vsub.f32 %v1514, 1.0
        %v1521 = vsub.f32 %v1516, 1.0
        %v1522 = vsub.f32 %v1518, 1.0
        %v1523 = vsel %vm1503, %v1485, %v1519
        %v1524 = vsel %vm1504, %v1490, %v1520
        %v1525 = vsel %vm1505, %v1495, %v1521
        %v1526 = vsel %vm1506, %v1500, %v1522
        %s1527 = smul.u32 %s26, 32
        %v1528 = vlaneseq
        %v1529 = vshrl.u32 %v1528, 7
        %v1530 = vadd.s32 %v1529, 8
        %v1531 = vadd.s32 %v1529, 16
        %v1532 = vadd.s32 %v1529, 24
        %v1533 = vstv %s1527
        %v1534 = vadd.s32 %v1533, %v1529
        %v1535 = vadd.s32 %v1533, %v1530
        %v1536 = vadd.s32 %v1533, %v1531
        %v1537 = vadd.s32 %v1533, %v1532
        %vm1538 = vcmp.lt.s32.totalorder %v1534, 48
        %vm1539 = vcmp.lt.s32.totalorder %v1535, 48
        %vm1540 = vcmp.lt.s32.totalorder %v1536, 48
        %vm1541 = vcmp.lt.s32.totalorder %v1537, 48
        %v1542 = vsel %vm1538, 1, 0
        %v1543 = vsel %vm1539, 1, 0
        %v1544 = vsel %vm1540, 1, 0
        %v1545 = vsel %vm1541, 1, 0
        %vm1546 = vcmp.eq.s32.totalorder %v1542, 1
        %vm1547 = vcmp.eq.s32.totalorder %v1543, 1
        %vm1548 = vcmp.eq.s32.totalorder %v1544, 1
        %vm1549 = vcmp.eq.s32.totalorder %v1545, 1
        %v1550 = vsel %vm1546, %v1523, 0.0
        %v1551 = vsel %vm1547, %v1524, 0.0
        %v1552 = vsel %vm1548, %v1525, 0.0
        %v1553 = vsel %vm1549, %v1526, 0.0
        %v1554 = vld [vmem:[#allocation3] sm:$0xff]
        %v1555 = vld [vmem:[#allocation3 + $0x8] sm:$0xff]
        %1556 = vxpose.xlu0.b32.start [1/16] %v794, 128
        %1557 = vxpose.xlu0.b32.cont [2/16] %v795, 128
        %1558 = vxpose.xlu0.b32.cont [3/16] %v796, 128
        %1559 = vxpose.xlu0.b32.cont [4/16] %v797, 128
        %1560 = vxpose.xlu0.b32.cont [5/16] 0.0, 128
        %1561 = vxpose.xlu0.b32.cont [6/16] 0.0, 128
        %1562 = vxpose.xlu0.b32.cont [7/16] 0.0, 128
        %1563 = vxpose.xlu0.b32.cont [8/16] 0.0, 128
        %1564 = vxpose.xlu0.b32.cont [9/16] 0.0, 128
        %1565 = vxpose.xlu0.b32.cont [10/16] 0.0, 128
        %1566 = vxpose.xlu0.b32.cont [11/16] 0.0, 128
        %1567 = vxpose.xlu0.b32.cont [12/16] 0.0, 128
        %1568 = vxpose.xlu0.b32.cont [13/16] 0.0, 128
        %1569 = vxpose.xlu0.b32.cont [14/16] 0.0, 128
        %1570 = vxpose.xlu0.b32.cont [15/16] 0.0, 128
        %1571 = vxpose.xlu0.b32.end [16/16] 0.0, 128
        %v1572 = vpop.trf.xlu0
        %v1573 = vpop.trf.xlu0
        %v1574 = vpop.trf.xlu0
        %v1575 = vpop.trf.xlu0
        %v1576 = vpop.trf.xlu0
        %v1577 = vpop.trf.xlu0
        %v1578 = vpop.trf.xlu0
        %v1579 = vpop.trf.xlu0
        %v1580 = vpop.trf.xlu0
        %v1581 = vpop.trf.xlu0
        %v1582 = vpop.trf.xlu0
        %v1583 = vpop.trf.xlu0
        %v1584 = vpop.trf.xlu0
        %v1585 = vpop.trf.xlu0
        %v1586 = vpop.trf.xlu0
        %v1587 = vpop.trf.xlu0
        %vm1588 = vcmask 261120
        %v1590 = vsel %vm1588, %v1572, 0
        %v1593 = vsel %vm1588, %v1573, 0
        %1595 = vmatprep.subr.mxu0 0.0
        %1596 = vmatpush1.msra.mxu0 0.0
        %1597 = vmatprep.subr.mxu0 0.0
        %1598 = vmatpush1.msra.mxu0 0.0
        %1599 = vmatprep.subr.mxu0 0.0
        %1600 = vmatpush1.msra.mxu0 0.0
        %1601 = vmatprep.subr.mxu0 0.0
        %1602 = vmatpush1.msra.mxu0 0.0
        %1603 = vmatprep.subr.mxu0 0.0
        %1604 = vmatpush1.msra.mxu0 0.0
        %1605 = vmatprep.subr.mxu0 0.0
        %1606 = vmatpush1.msra.mxu0 0.0
        %1607 = vmatprep.subr.mxu0 0.0
        %1608 = vmatpush1.msra.mxu0 0.0
        %1609 = vmatprep.subr.mxu0 0.0
        %1610 = vmatpush1.msra.mxu0 0.0
        %1611 = vmatprep.subr.mxu0 0.0
        %1612 = vmatpush1.msra.mxu0 0.0
        %1613 = vmatprep.subr.mxu0 0.0
        %1614 = vmatpush1.msra.mxu0 0.0
        %1615 = vmatprep.subr.mxu0 0.0
        %1616 = vmatpush1.msra.mxu0 0.0
        %1617 = vmatprep.subr.mxu0 0.0
        %1618 = vmatpush1.msra.mxu0 0.0
        %1619 = vmatprep.subr.mxu0 0.0
        %1620 = vmatpush1.msra.mxu0 %v1553
        %1621 = vmatprep.subr.mxu0 0.0
        %1622 = vmatpush1.msra.mxu0 %v1552
        %1623 = vmatprep.subr.mxu0 0.0
        %1624 = vmatpush1.msra.mxu0 %v1551
        %1625 = vmatprep.subr.mxu0 0.0
        %1626 = vmatpush1.msra.mxu0 %v1550
        %1627 = vmatprep.subr.mxu0 0.0
        %1628 = vmatpush2.msra.mxu0 0.0
        %1629 = vmatprep.subr.mxu0 0.0
        %1630 = vmatpush2.msra.mxu0 0.0
        %1631 = vmatprep.subr.mxu0 0.0
        %1632 = vmatpush2.msra.mxu0 0.0
        %1633 = vmatprep.subr.mxu0 0.0
        %1634 = vmatpush2.msra.mxu0 0.0
        %1635 = vmatprep.subr.mxu0 0.0
        %1636 = vmatpush2.msra.mxu0 0.0
        %1637 = vmatprep.subr.mxu0 0.0
        %1638 = vmatpush2.msra.mxu0 0.0
        %1639 = vmatprep.subr.mxu0 0.0
        %1640 = vmatpush2.msra.mxu0 0.0
        %1641 = vmatprep.subr.mxu0 0.0
        %1642 = vmatpush2.msra.mxu0 0.0
        %1643 = vmatprep.subr.mxu0 0.0
        %1644 = vmatpush2.msra.mxu0 0.0
        %1645 = vmatprep.subr.mxu0 0.0
        %1646 = vmatpush2.msra.mxu0 0.0
        %1647 = vmatprep.subr.mxu0 0.0
        %1648 = vmatpush2.msra.mxu0 0.0
        %1649 = vmatprep.subr.mxu0 0.0
        %1650 = vmatpush2.msra.mxu0 0.0
        %1651 = vmatprep.subr.mxu0 0.0
        %1652 = vmatpush2.msra.mxu0 0.0
        %1653 = vmatprep.subr.mxu0 0.0
        %1654 = vmatpush2.msra.mxu0 0.0
        %1655 = vmatprep.subr.mxu0 0.0
        %1656 = vmatpush2.msra.mxu0 0.0
        %1657 = vmatprep.subr.mxu0 0.0
        %1658 = vmatpush2.msra.mxu0 0.0
        %1659 = vmatprep.mubr.f32.mxu0 0.0
        %1660 = vmatmul.mubr.f32.gmra.mxu0 %v1590
        %v1661 = vpop.f32.mrf.mxu0
        %v1662 = vadd.f32 0.0, %v1661
        %v1663 = vpop.f32.mrf.mxu0
        %1664 = vmatprep.mubr.f32.mxu0 0.0
        %1665 = vmatmul.mubr.f32.gmra.mxu0 %v1593
        %v1666 = vpop.f32.mrf.mxu0
        %v1667 = vadd.f32 0.0, %v1666
        %v1668 = vpop.f32.mrf.mxu0
        %1669 = vdwg.mxu0
        %v1670 = vadd.f32 %v1554, %v1662
        %v1671 = vadd.f32 %v1555, %v1667
        %1672 = vst [vmem:[#allocation3] sm:$0xff] %v1670
        %1673 = vst [vmem:[#allocation3 + $0x8] sm:$0xff] %v1671
        %p1674 = scmp.eq.s32.totalorder %s26, 1
        // Predicated region
        $region73: #{resblock_forward.1} parent=67 // pred_check
          %p1675 = pneg %p1674
        $region74: #{resblock_forward.1} parent=67 // pred_check_branch
          %1677 = sbr.rel (%p1675) target = $region76
        $region75: #{resblock_forward.1} parent=67 // pred_region
          %v1678 = vld [vmem:[#allocation3] sm:$0xff]
          %v1679 = vld [vmem:[#allocation3 + $0x8] sm:$0xff]
          %v1680 = vld [vmem:[%s4] sm:$0xff]
          %v1681 = vld [vmem:[%s4 + $0x8] sm:$0xff]
          %1683 = vset.pattern.permute.xlu0 0
          %1684 = vperm.xlu0 %1683, %v1680
          %v1685 = vpop.permute.xlu0 %1684
          %1688 = vset.pattern.permute.xlu0 0
          %1689 = vperm.xlu0 %1688, %v1681
          %v1690 = vpop.permute.xlu0 %1689
          %v1692 = vmul.f32 %v1678, %v1685
          %v1693 = vmul.f32 %v1679, %v1690
          %v1694 = vld [vmem:[#allocation2] sm:$0xff]
          %v1695 = vld [vmem:[#allocation2 + $0x8] sm:$0xff]
          %v1696 = vld [vmem:[%s8] sm:$0xff]
          %v1697 = vld [vmem:[%s8 + $0x8] sm:$0xff]
          %v1698 = vld [vmem:[%s8 + $0x10] sm:$0xff]
          %v1699 = vld [vmem:[%s8 + $0x18] sm:$0xff]
          %v1700 = vld [vmem:[%s8 + $0x20] sm:$0xff]
          %v1701 = vld [vmem:[%s8 + $0x28] sm:$0xff]
          %v1702 = vld [vmem:[%s8 + $0x30] sm:$0xff]
          %v1703 = vld [vmem:[%s8 + $0x38] sm:$0xff]
          %v1704 = vld [vmem:[%s8 + $0x40] sm:$0xff]
          %v1705 = vld [vmem:[%s8 + $0x48] sm:$0xff]
          %v1706 = vld [vmem:[%s8 + $0x50] sm:$0xff]
          %v1707 = vld [vmem:[%s8 + $0x58] sm:$0xff]
          %v1708 = vld [vmem:[%s8 + $0x60] sm:$0xff]
          %v1709 = vld [vmem:[%s8 + $0x68] sm:$0xff]
          %v1710 = vld [vmem:[%s8 + $0x70] sm:$0xff]
          %v1711 = vld [vmem:[%s8 + $0x78] sm:$0xff]
          %v1712 = vld [vmem:[%s8 + $0x80] sm:$0xff]
          %v1713 = vld [vmem:[%s8 + $0x88] sm:$0xff]
          %v1714 = vld [vmem:[%s8 + $0x90] sm:$0xff]
          %v1715 = vld [vmem:[%s8 + $0x98] sm:$0xff]
          %v1716 = vld [vmem:[%s8 + $0xa0] sm:$0xff]
          %v1717 = vld [vmem:[%s8 + $0xa8] sm:$0xff]
          %v1718 = vld [vmem:[%s8 + $0xb0] sm:$0xff]
          %v1719 = vld [vmem:[%s8 + $0xb8] sm:$0xff]
          %v1720 = vld [vmem:[%s8 + $0xc0] sm:$0xff]
          %v1721 = vld [vmem:[%s8 + $0xc8] sm:$0xff]
          %v1722 = vld [vmem:[%s8 + $0xd0] sm:$0xff]
          %v1723 = vld [vmem:[%s8 + $0xd8] sm:$0xff]
          %v1724 = vld [vmem:[%s8 + $0xe0] sm:$0xff]
          %v1725 = vld [vmem:[%s8 + $0xe8] sm:$0xff]
          %v1726 = vld [vmem:[%s8 + $0xf0] sm:$0xff]
          %v1727 = vld [vmem:[%s8 + $0xf8] sm:$0xff]
          %v1728 = vld [vmem:[%s10 + $0x4] sm:$0x1]
          %v1729 = vlaneseq
          %v1730 = vshrl.u32 %v1729, 7
          %v1731 = vsub.s32 0, %v1730
          %v1732 = vrot.slane %v1728, %v1731
          %1733 = vmatprep.subr.mxu0 0.0
          %1734 = vmatpush1.msra.mxu0 %v1711
          %1735 = vmatprep.subr.mxu0 0.0
          %1736 = vmatpush1.msra.mxu0 %v1710
          %1737 = vmatprep.subr.mxu0 0.0
          %1738 = vmatpush1.msra.mxu0 %v1709
          %1739 = vmatprep.subr.mxu0 0.0
          %1740 = vmatpush1.msra.mxu0 %v1708
          %1741 = vmatprep.subr.mxu0 0.0
          %1742 = vmatpush1.msra.mxu0 %v1707
          %1743 = vmatprep.subr.mxu0 0.0
          %1744 = vmatpush1.msra.mxu0 %v1706
          %1745 = vmatprep.subr.mxu0 0.0
          %1746 = vmatpush1.msra.mxu0 %v1705
          %1747 = vmatprep.subr.mxu0 0.0
          %1748 = vmatpush1.msra.mxu0 %v1704
          %1749 = vmatprep.subr.mxu0 0.0
          %1750 = vmatpush1.msra.mxu0 %v1703
          %1751 = vmatprep.subr.mxu0 0.0
          %1752 = vmatpush1.msra.mxu0 %v1702
          %1753 = vmatprep.subr.mxu0 0.0
          %1754 = vmatpush1.msra.mxu0 %v1701
          %1755 = vmatprep.subr.mxu0 0.0
          %1756 = vmatpush1.msra.mxu0 %v1700
          %1757 = vmatprep.subr.mxu0 0.0
          %1758 = vmatpush1.msra.mxu0 %v1699
          %1759 = vmatprep.subr.mxu0 0.0
          %1760 = vmatpush1.msra.mxu0 %v1698
          %1761 = vmatprep.subr.mxu0 0.0
          %1762 = vmatpush1.msra.mxu0 %v1697
          %1763 = vmatprep.subr.mxu0 0.0
          %1764 = vmatpush1.msra.mxu0 %v1696
          %1765 = vmatprep.subr.mxu0 0.0
          %1766 = vmatpush2.msra.mxu0 %v1727
          %1767 = vmatprep.subr.mxu0 0.0
          %1768 = vmatpush2.msra.mxu0 %v1726
          %1769 = vmatprep.subr.mxu0 0.0
          %1770 = vmatpush2.msra.mxu0 %v1725
          %1771 = vmatprep.subr.mxu0 0.0
          %1772 = vmatpush2.msra.mxu0 %v1724
          %1773 = vmatprep.subr.mxu0 0.0
          %1774 = vmatpush2.msra.mxu0 %v1723
          %1775 = vmatprep.subr.mxu0 0.0
          %1776 = vmatpush2.msra.mxu0 %v1722
          %1777 = vmatprep.subr.mxu0 0.0
          %1778 = vmatpush2.msra.mxu0 %v1721
          %1779 = vmatprep.subr.mxu0 0.0
          %1780 = vmatpush2.msra.mxu0 %v1720
          %1781 = vmatprep.subr.mxu0 0.0
          %1782 = vmatpush2.msra.mxu0 %v1719
          %1783 = vmatprep.subr.mxu0 0.0
          %1784 = vmatpush2.msra.mxu0 %v1718
          %1785 = vmatprep.subr.mxu0 0.0
          %1786 = vmatpush2.msra.mxu0 %v1717
          %1787 = vmatprep.subr.mxu0 0.0
          %1788 = vmatpush2.msra.mxu0 %v1716
          %1789 = vmatprep.subr.mxu0 0.0
          %1790 = vmatpush2.msra.mxu0 %v1715
          %1791 = vmatprep.subr.mxu0 0.0
          %1792 = vmatpush2.msra.mxu0 %v1714
          %1793 = vmatprep.subr.mxu0 0.0
          %1794 = vmatpush2.msra.mxu0 %v1713
          %1795 = vmatprep.subr.mxu0 0.0
          %1796 = vmatpush2.msra.mxu0 %v1712
          %1797 = vmatprep.mubr.f32.mxu0 %v1692
          %1798 = vmatmul.mubr.f32.gmra.mxu0 %v1694
          %v1799 = vpop.f32.mrf.mxu0
          %v1800 = vadd.f32 %v1732, %v1799
          %v1801 = vpop.f32.mrf.mxu0
          %1802 = vmatprep.mubr.f32.mxu0 %v1693
          %1803 = vmatmul.mubr.f32.gmra.mxu0 %v1695
          %v1804 = vpop.f32.mrf.mxu0
          %v1805 = vadd.f32 %v1732, %v1804
          %v1806 = vpop.f32.mrf.mxu0
          %1807 = vdwg.mxu0
          %vm1808 = vcmp.gt.f32.partialorder %v1800, 0.0
          %vm1809 = vcmp.gt.f32.partialorder %v1805, 0.0
          %v1810 = vmin.f32 %v1800, 0.0
          %v1811 = vmin.f32 %v1805, 0.0
          %v1812 = vmul.f32 %v1810, 1.442695
          %v1813 = vpow.pop %v1812
          %v1814 = vmul.f32 %v1811, 1.442695
          %v1815 = vpow.pop %v1814
          %v1816 = vsub.f32 %v1813, 1.0
          %v1817 = vsub.f32 %v1815, 1.0
          %v1818 = vsel %vm1808, %v1800, %v1816
          %v1819 = vsel %vm1809, %v1805, %v1817
          %v1820 = vld [vmem:[%s9] sm:$0xff]
          %v1821 = vld [vmem:[%s9 + $0x8] sm:$0xff]
          %v1822 = vld [vmem:[%s9 + $0x10] sm:$0xff]
          %v1823 = vld [vmem:[%s9 + $0x18] sm:$0xff]
          %v1824 = vld [vmem:[%s9 + $0x20] sm:$0xff]
          %v1825 = vld [vmem:[%s9 + $0x28] sm:$0xff]
          %v1826 = vld [vmem:[%s9 + $0x30] sm:$0xff]
          %v1827 = vld [vmem:[%s9 + $0x38] sm:$0xff]
          %v1828 = vld [vmem:[%s9 + $0x40] sm:$0xff]
          %v1829 = vld [vmem:[%s9 + $0x48] sm:$0xff]
          %v1830 = vld [vmem:[%s9 + $0x50] sm:$0xff]
          %v1831 = vld [vmem:[%s9 + $0x58] sm:$0xff]
          %v1832 = vld [vmem:[%s9 + $0x60] sm:$0xff]
          %v1833 = vld [vmem:[%s9 + $0x68] sm:$0xff]
          %v1834 = vld [vmem:[%s9 + $0x70] sm:$0xff]
          %v1835 = vld [vmem:[%s9 + $0x78] sm:$0xff]
          %v1836 = vld [vmem:[%s11] sm:$0x1]
          %v1837 = vlaneseq
          %v1838 = vshrl.u32 %v1837, 7
          %v1839 = vsub.s32 0, %v1838
          %v1840 = vrot.slane %v1836, %v1839
          %1841 = vmatprep.subr.mxu0 0.0
          %1842 = vmatpush1.msra.mxu0 %v1835
          %1843 = vmatprep.subr.mxu0 0.0
          %1844 = vmatpush1.msra.mxu0 %v1834
          %1845 = vmatprep.subr.mxu0 0.0
          %1846 = vmatpush1.msra.mxu0 %v1833
          %1847 = vmatprep.subr.mxu0 0.0
          %1848 = vmatpush1.msra.mxu0 %v1832
          %1849 = vmatprep.subr.mxu0 0.0
          %1850 = vmatpush1.msra.mxu0 %v1831
          %1851 = vmatprep.subr.mxu0 0.0
          %1852 = vmatpush1.msra.mxu0 %v1830
          %1853 = vmatprep.subr.mxu0 0.0
          %1854 = vmatpush1.msra.mxu0 %v1829
          %1855 = vmatprep.subr.mxu0 0.0
          %1856 = vmatpush1.msra.mxu0 %v1828
          %1857 = vmatprep.subr.mxu0 0.0
          %1858 = vmatpush1.msra.mxu0 %v1827
          %1859 = vmatprep.subr.mxu0 0.0
          %1860 = vmatpush1.msra.mxu0 %v1826
          %1861 = vmatprep.subr.mxu0 0.0
          %1862 = vmatpush1.msra.mxu0 %v1825
          %1863 = vmatprep.subr.mxu0 0.0
          %1864 = vmatpush1.msra.mxu0 %v1824
          %1865 = vmatprep.subr.mxu0 0.0
          %1866 = vmatpush1.msra.mxu0 %v1823
          %1867 = vmatprep.subr.mxu0 0.0
          %1868 = vmatpush1.msra.mxu0 %v1822
          %1869 = vmatprep.subr.mxu0 0.0
          %1870 = vmatpush1.msra.mxu0 %v1821
          %1871 = vmatprep.subr.mxu0 0.0
          %1872 = vmatpush1.msra.mxu0 %v1820
          %1873 = vmatprep.subr.mxu0 0.0
          %1874 = vmatpush2.msra.mxu0 0.0
          %1875 = vmatprep.subr.mxu0 0.0
          %1876 = vmatpush2.msra.mxu0 0.0
          %1877 = vmatprep.subr.mxu0 0.0
          %1878 = vmatpush2.msra.mxu0 0.0
          %1879 = vmatprep.subr.mxu0 0.0
          %1880 = vmatpush2.msra.mxu0 0.0
          %1881 = vmatprep.subr.mxu0 0.0
          %1882 = vmatpush2.msra.mxu0 0.0
          %1883 = vmatprep.subr.mxu0 0.0
          %1884 = vmatpush2.msra.mxu0 0.0
          %1885 = vmatprep.subr.mxu0 0.0
          %1886 = vmatpush2.msra.mxu0 0.0
          %1887 = vmatprep.subr.mxu0 0.0
          %1888 = vmatpush2.msra.mxu0 0.0
          %1889 = vmatprep.subr.mxu0 0.0
          %1890 = vmatpush2.msra.mxu0 0.0
          %1891 = vmatprep.subr.mxu0 0.0
          %1892 = vmatpush2.msra.mxu0 0.0
          %1893 = vmatprep.subr.mxu0 0.0
          %1894 = vmatpush2.msra.mxu0 0.0
          %1895 = vmatprep.subr.mxu0 0.0
          %1896 = vmatpush2.msra.mxu0 0.0
          %1897 = vmatprep.subr.mxu0 0.0
          %1898 = vmatpush2.msra.mxu0 0.0
          %1899 = vmatprep.subr.mxu0 0.0
          %1900 = vmatpush2.msra.mxu0 0.0
          %1901 = vmatprep.subr.mxu0 0.0
          %1902 = vmatpush2.msra.mxu0 0.0
          %1903 = vmatprep.subr.mxu0 0.0
          %1904 = vmatpush2.msra.mxu0 0.0
          %1905 = vmatprep.mubr.f32.mxu0 0.0
          %1906 = vmatmul.mubr.f32.gmra.mxu0 %v1818
          %v1907 = vpop.f32.mrf.mxu0
          %v1908 = vadd.f32 %v1840, %v1907
          %v1909 = vpop.f32.mrf.mxu0
          %1910 = vmatprep.mubr.f32.mxu0 0.0
          %1911 = vmatmul.mubr.f32.gmra.mxu0 %v1819
          %v1912 = vpop.f32.mrf.mxu0
          %v1913 = vadd.f32 %v1840, %v1912
          %v1914 = vpop.f32.mrf.mxu0
          %1915 = vdwg.mxu0
          %v1916 = vld [vmem:[%s2] sm:$0xff]
          %v1917 = vld [vmem:[%s2 + $0x8] sm:$0xff]
          %v1918 = vadd.f32 %v1908, %v1916
          %v1919 = vadd.f32 %v1913, %v1917
          %vm1920 = vcmp.gt.f32.partialorder %v1918, 0.0
          %vm1921 = vcmp.gt.f32.partialorder %v1919, 0.0
          %v1922 = vmin.f32 %v1918, 0.0
          %v1923 = vmin.f32 %v1919, 0.0
          %v1924 = vmul.f32 %v1922, 1.442695
          %v1925 = vpow.pop %v1924
          %v1926 = vmul.f32 %v1923, 1.442695
          %v1927 = vpow.pop %v1926
          %v1928 = vsub.f32 %v1925, 1.0
          %v1929 = vsub.f32 %v1927, 1.0
          %v1930 = vsel %vm1920, %v1918, %v1928
          %v1931 = vsel %vm1921, %v1919, %v1929
          %1932 = vst [vmem:[#allocation4] sm:$0xff] %v1930
          %1933 = vst [vmem:[#allocation4 + $0x8] sm:$0xff] %v1931
        $region76: #{resblock_forward.1} parent=67 // pred_fallthru
          _
        %s1934 = smul.u32 4, %s26
        %p1935 = scmp.lt.s32.totalorder %s1934, 7
        %s1936 = scalar_select %p1935, %s1934, 7
        %s1937 = smul.addr %s1936, 8
        %s1938 = scalar_lea.vmem %s13, %s1937
        // Predicated region
        $region77: #{resblock_forward.1} parent=67 // pred_check
          %p1939 = pneg %p306
        $region78: #{resblock_forward.1} parent=67 // pred_check_branch
          %1941 = sbr.rel (%p1939) target = $region80
        $region79: #{resblock_forward.1} parent=67 // pred_region
          %s1943 = ssub.s32 256, 256
          %1944 = vsyncadd [#allocation5], %s1943
          %s1945 = sshll.u32 [#allocation4], 4
          %s1946 = int_to_ptr.vmem [resolvable:$true] %s1945
          %1951 = dma.vmem_to_hbm [thread:$0]  %s1946, 256, %s12, [#allocation5], 128, 128, 8
        $region80: #{resblock_forward.1} parent=67 // pred_fallthru
          _
        // Predicated region
        $region81: #{resblock_forward.1} parent=67 // pred_check
          %p1952 = pneg %p332
        $region82: #{resblock_forward.1} parent=67 // pred_check_branch
          %1954 = sbr.rel (%p1952) target = $region84
        $region83: #{resblock_forward.1} parent=67 // pred_region
          %s1955 = smul.u32 4, %s26
        $region84: #{resblock_forward.1} parent=67 // pred_fallthru
          _
        // Predicated region
        $region85: #{resblock_forward.1} parent=67 // pred_check
          %p1956 = pneg %p306
        $region86: #{resblock_forward.1} parent=67 // pred_check_branch
          %1958 = sbr.rel (%p1956) target = $region88
        $region87: #{resblock_forward.1} parent=67 // pred_region
          %1959 = dma.done [#allocation5], 256
        $region88: #{resblock_forward.1} parent=67 // pred_fallthru
          _
      $region68: #{resblock_forward.1} parent=5 // pred_fallthru
        _
      %p1960 = scmp.le.s32.totalorder 2, %s21
      // Predicated region
      $region89: #{resblock_forward.1} parent=5 // pred_check
        %p1961 = pneg %p1960
      $region90: #{resblock_forward.1} parent=5 // pred_check_branch
        %1963 = sbr.rel (%p1961) target = $region92
      $region91: #{resblock_forward.1} parent=5 // pred_region
        %s1964 = ssub.s32 %s21, 2
        // Predicated region
        $region93: #{resblock_forward.1} parent=91 // pred_check
          %p1965 = pneg %p338
        $region94: #{resblock_forward.1} parent=91 // pred_check_branch
          %1967 = sbr.rel (%p1965) target = $region96
        $region95: #{resblock_forward.1} parent=91 // pred_region
          %s1968 = smul.u32 4, %s27
          %p1969 = scmp.lt.s32.totalorder %s1968, 7
          %s1970 = scalar_select %p1969, %s1968, 7
          %s1971 = smul.addr %s1970, 8
          %s1972 = scalar_lea.vmem %s13, %s1971
        $region96: #{resblock_forward.1} parent=91 // pred_fallthru
          _
      $region92: #{resblock_forward.1} parent=5 // pred_fallthru
        _
    $region6: #{resblock_forward.1} parent=1 // loop_footer
      %s25 = sadd.s32 1, %s21
    $region7: #{resblock_forward.1} parent=1 // loop_footer_branch
      %20 = sbr.rel target = $region3
    $region8: #{resblock_forward.1} parent=1 // loop_exit
      _
    %1973 = vsyncpa [#allocation5], 1
    %s1974 = scalar_lea.sflag [#allocation5], 1
    %1975 = vsyncpa %s1974, 1

</llo_original>
